<compile_context>
chip_gen: v7x
topology: tpu7x:2x2x1
jax: 0.10.0
libtpu: 0.0.40
codegen_flags: <defaults>
</compile_context>

<pallas_src>
import functools

import jax
import jax.numpy as jnp
from jax.experimental import pallas as pl
from jax.experimental.pallas import tpu as pltpu


def _round_up(x, m):
    return (x + m - 1) // m * m


def _tpu_generation():
    """Best-effort TPU generation from device_kind (None if unknown)."""
    try:
        kind = jax.devices()[0].device_kind.lower()
    except Exception:
        return None
    for g in (7, 6, 5, 4, 3, 2):
        if f"v{g}" in kind:
            return g
    return None


def _make_spec(shape, index_map, buffers=None):
    """BlockSpec with optional pipeline_mode=pl.Buffered(n); falls back cleanly."""
    if buffers is not None and hasattr(pl, "Buffered"):
        try:
            return pl.BlockSpec(shape, index_map, pipeline_mode=pl.Buffered(buffers))
        except TypeError:
            pass
    return pl.BlockSpec(shape, index_map)


def _sig(a):
    # sigmoid(a) == 0.5 * (tanh(0.5*a) + 1): single EUP op + cheap VPU ops.
    return 0.5 * (jnp.tanh(0.5 * a) + 1.0)


# ----------------------------------------------------------------------------- kernel
def _pglu_b_kernel(x_ref, h_ref, p_ref,
                   wx_ref, wh_rz_ref, wc_h_ref,
                   b_ref, tresh_ref, decay_ref,
                   act_ref, png_ref, *, hp):
    x_bf = x_ref[...]                           # (tb, Ip) bf16 (cast host-side)
    h = h_ref[...]                              # (tb, Hp) f32
    h_bf = h.astype(jnp.bfloat16)

    # Fused gate pre-activations (3 wide MXU ops instead of 6 narrow ones).
    pre_x = jnp.dot(x_bf, wx_ref[...],
                    preferred_element_type=jnp.float32) + b_ref[...]        # (tb, 3*Hp)
    pre_h = jnp.dot(h_bf, wh_rz_ref[...],
                    preferred_element_type=jnp.float32)                      # (tb, 2*Hp)

    r = _sig(pre_x[:, 0 * hp:1 * hp] + pre_h[:, 0 * hp:1 * hp])
    z = _sig(pre_x[:, 1 * hp:2 * hp] + pre_h[:, 1 * hp:2 * hp])

    rh_bf = (r * h).astype(jnp.bfloat16)
    n = jnp.tanh(pre_x[:, 2 * hp:3 * hp]
                 + jnp.dot(rh_bf, wc_h_ref[...],
                           preferred_element_type=jnp.float32))

    h_new = h + z * (n - h)                     # == (1 - z) * h + z * n
    potential = p_ref[...] + h_new

    # relu(potential - tresh) > 0  <=>  potential > tresh
    gate = potential > tresh_ref[...]
    act_ref[...] = jnp.where(gate, potential, 0.0)
    png_ref[...] = jnp.where(gate, 0.0, potential * decay_ref[...])


# ----------------------------------------------------------------------------- wrapper
def pglu_b_forward(x, h_prev, potential_prev, kparams, *, block_b=512):
    """x:(B,I), h_prev/potential_prev:(B,H); kparams from prepare_params()."""
    B, I = x.shape
    H = h_prev.shape[1]
    Hp = kparams["hp"]
    Ip = kparams["ip"]

    gen = _tpu_generation()

    # --- batch tiling: no near-2x padding for awkward B; both TCs busy on v7x.
    B8 = _round_up(B, 8)
    grid_b = max(1, pl.cdiv(B8, block_b))
    if gen is not None and gen >= 7:
        if grid_b == 1 and B8 >= 16:
            grid_b = 2                              # use both TensorCores
        if grid_b > 1 and grid_b % 2:
            grid_b += 1                             # even split across 2 TCs
    tb = _round_up(pl.cdiv(B8, grid_b), 8)
    Bp = tb * grid_b

    # --- generation-aware VMEM budget & activation prefetch depth.
    if gen is not None and gen >= 7:
        vmem_limit = 56 * 1024 * 1024               # v7x: 64 MiB physical / TC
    elif gen in (5, 6):
        vmem_limit = 100 * 1024 * 1024              # 128 MiB parts
    else:
        vmem_limit = 64 * 1024 * 1024
    act_buffers = 3 if gen == 5 else None           # v5e: hide slow-HBM input DMA

    def pad_cast(a, rows, cols, dtype):
        a = a.astype(dtype)
        if a.shape == (rows, cols):
            return a                                # skip copy when already padded
        return jnp.pad(a, ((0, rows - a.shape[0]), (0, cols - a.shape[1])))

    x_p = pad_cast(x, Bp, Ip, jnp.bfloat16)         # bf16 halves x HBM bytes
    h_p = pad_cast(h_prev, Bp, Hp, jnp.float32)     # f32 (needed for h_new update)
    p_p = pad_cast(potential_prev, Bp, Hp, jnp.float32)

    def build_specs(use_pipeline_mode):
        ab = act_buffers if use_pipeline_mode else None
        wb = 1 if use_pipeline_mode else None       # weights: single-buffered, resident
        in_specs = [
            _make_spec((tb, Ip), lambda i: (i, 0), ab),       # x (per B tile)
            _make_spec((tb, Hp), lambda i: (i, 0), ab),       # h_prev
            _make_spec((tb, Hp), lambda i: (i, 0), ab),       # potential_prev
            _make_spec((Ip, 3 * Hp), lambda i: (0, 0), wb),   # fused x-side weights
            _make_spec((Hp, 2 * Hp), lambda i: (0, 0), wb),   # fused h-side weights r,z
            _make_spec((Hp, Hp), lambda i: (0, 0), wb),       # candidate h-side weight
            _make_spec((1, 3 * Hp), lambda i: (0, 0), wb),    # fused biases
            _make_spec((1, Hp), lambda i: (0, 0), wb),        # tresh
            _make_spec((1, Hp), lambda i: (0, 0), wb),        # decay
        ]
        out_specs = (
            pl.BlockSpec((tb, Hp), lambda i: (i, 0)),
            pl.BlockSpec((tb, Hp), lambda i: (i, 0)),
        )
        return in_specs, out_specs

    flops = 2 * Bp * (Ip * 3 * Hp + Hp * 2 * Hp + Hp * Hp)
    transcendentals = 3 * Bp * Hp
    bytes_accessed = (
        x_p.size * 2 + (h_p.size + p_p.size) * 4
        + (kparams["wx"].size + kparams["wh_rz"].size + kparams["wc_h"].size) * 2
        + (kparams["b"].size + kparams["tresh"].size + kparams["decay"].size) * 4
        + 2 * Bp * Hp * 4
    )

    def run(use_pipeline_mode):
        in_specs, out_specs = build_specs(use_pipeline_mode)
        return pl.pallas_call(
            functools.partial(_pglu_b_kernel, hp=Hp),
            out_shape=(jax.ShapeDtypeStruct((Bp, Hp), jnp.float32),
                       jax.ShapeDtypeStruct((Bp, Hp), jnp.float32)),
            grid=(grid_b,),
            in_specs=in_specs,
            out_specs=out_specs,
            # Reuse potential_prev's (padded, kernel-local) HBM buffer for the
            # decayed-potential output.
            input_output_aliases={2: 1},
            compiler_params=pltpu.CompilerParams(
                dimension_semantics=("parallel",),
                vmem_limit_bytes=vmem_limit),
            cost_estimate=pl.CostEstimate(flops=flops,
                                          transcendentals=transcendentals,
                                          bytes_accessed=bytes_accessed),
        )(x_p, h_p, p_p,
          kparams["wx"], kparams["wh_rz"], kparams["wc_h"],
          kparams["b"], kparams["tresh"], kparams["decay"])

    try:
        act_p, png_p = run(True)
    except Exception:
        # Older jax builds without BlockSpec(pipeline_mode=...) support.
        act_p, png_p = run(False)

    return act_p[:B, :H], png_p[:B, :H]


# ----------------------------------------------------------------------------- params
def init_params(key, input_size, hidden_size):
    """Raw params mirroring the PyTorch module's __init__ (float32)."""
    ks = jax.random.split(key, 5)
    mu, sigma = 0.0, 0.3
    mu_decay, sigma_decay = 0.1, 0.7

    tresh = jnp.abs(jax.random.uniform(ks[0], (hidden_size,))) * sigma + mu
    decay = jnp.abs(jax.random.uniform(ks[1], (hidden_size,))) * sigma_decay + mu_decay

    def linear(k, fan_in, fan_out):
        kw, kb = jax.random.split(k)
        bound = 1.0 / (fan_in ** 0.5)
        w = jax.random.uniform(kw, (fan_out, fan_in), minval=-bound, maxval=bound)
        b = jax.random.uniform(kb, (fan_out,), minval=-bound, maxval=bound)
        return w, b

    in_feat = input_size + hidden_size
    wr, br = linear(ks[2], in_feat, hidden_size)
    wz, bz = linear(ks[3], in_feat, hidden_size)
    wc, bc = linear(ks[4], in_feat, hidden_size)

    f32 = lambda a: a.astype(jnp.float32)
    return {"wr": f32(wr), "br": f32(br), "wz": f32(wz), "bz": f32(bz),
            "wc": f32(wc), "bc": f32(bc), "tresh": f32(tresh), "decay": f32(decay)}


def prepare_params(raw, input_size, hidden_size):
    """One-time host-side prep: split W.T into x/h parts, fuse along N, pad H and I
    to multiples of 128, cast matmul weights to bf16 (halves weight DMA bytes)."""
    I, H = input_size, hidden_size
    Hp = _round_up(H, 128)
    Ip = _round_up(I, 128)      # lane-dense x tiles / clean MXU contracting dim

    def split_t(w):             # nn.Linear: y = x @ W.T ; split W.T rows into x/h parts
        wt = w.T                # (I+H, H)
        return wt[:I, :], wt[I:, :]

    wr_x, wr_h = split_t(raw["wr"])
    wz_x, wz_h = split_t(raw["wz"])
    wc_x, wc_h = split_t(raw["wc"])

    pad_c = lambda a: jnp.pad(a, ((0, 0), (0, Hp - a.shape[1])))
    pad_r = lambda a, rows: jnp.pad(a, ((0, rows - a.shape[0]), (0, 0)))
    pad_v = lambda v: jnp.pad(v, (0, Hp - v.shape[0])).reshape(1, Hp)

    wx = jnp.concatenate([pad_c(wr_x), pad_c(wz_x), pad_c(wc_x)], axis=1)        # (I, 3Hp)
    wx = pad_r(wx, Ip)                                                            # (Ip, 3Hp)
    wh_rz = jnp.concatenate([pad_c(pad_r(wr_h, Hp)), pad_c(pad_r(wz_h, Hp))],
                            axis=1)                                               # (Hp, 2Hp)
    wc_h_p = pad_c(pad_r(wc_h, Hp))                                               # (Hp, Hp)
    b = jnp.concatenate([pad_v(raw["br"]), pad_v(raw["bz"]), pad_v(raw["bc"])], axis=1)

    return {
        "hp": Hp,
        "ip": Ip,
        "wx": wx.astype(jnp.bfloat16),
        "wh_rz": wh_rz.astype(jnp.bfloat16),
        "wc_h": wc_h_p.astype(jnp.bfloat16),
        "b": b.astype(jnp.float32),
        "tresh": pad_v(raw["tresh"]).astype(jnp.float32),
        "decay": pad_v(raw["decay"]).astype(jnp.float32),
    }


# ----------------------------------------------------------------------------- reference
def pglu_b_reference(x, h_prev, p_prev, raw, input_size):
    """Pure-JAX reference (bf16 matmul operands, f32 accumulation — matches kernel)."""
    I = input_size
    bf = lambda a: a.astype(jnp.bfloat16)
    mm = lambda a, w: jnp.dot(bf(a), bf(w), preferred_element_type=jnp.float32)

    wr_x, wr_h = raw["wr"].T[:I], raw["wr"].T[I:]
    wz_x, wz_h = raw["wz"].T[:I], raw["wz"].T[I:]
    wc_x, wc_h = raw["wc"].T[:I], raw["wc"].T[I:]

    r = _sig(mm(x, wr_x) + mm(h_prev, wr_h) + raw["br"])
    z = _sig(mm(x, wz_x) + mm(h_prev, wz_h) + raw["bz"])
    n = jnp.tanh(mm(x, wc_x) + mm(r * h_prev, wc_h) + raw["bc"])
    h_new = (1.0 - z) * h_prev + z * n
    potential = p_prev + h_new
    gate = potential > raw["tresh"]
    activated = jnp.where(gate, potential, 0.0)
    png = jnp.where(gate, 0.0, potential * raw["decay"])
    return activated, png


# ----------------------------------------------------------------------------- test
if __name__ == "__main__":
    B, INPUT, HIDDEN = 2, 4, 32
    key = jax.random.PRNGKey(0)
    k_x, k_h, k_p, k_params = jax.random.split(key, 4)

    x = jax.random.normal(k_x, (B, INPUT), dtype=jnp.float32)
    h_prev = jax.random.normal(k_h, (B, HIDDEN), dtype=jnp.float32)
    potential_prev = jax.random.normal(k_p, (B, HIDDEN), dtype=jnp.float32)

    raw = init_params(k_params, INPUT, HIDDEN)
    kparams = prepare_params(raw, INPUT, HIDDEN)

    activated, potential_non_gated = pglu_b_forward(x, h_prev, potential_prev, kparams)
    jax.block_until_ready((activated, potential_non_gated))

    ref_act, ref_png = pglu_b_reference(x, h_prev, potential_prev, raw, INPUT)
    assert activated.shape == (B, HIDDEN) and potential_non_gated.shape == (B, HIDDEN)
    assert jnp.allclose(activated, ref_act, atol=5e-4, rtol=5e-4)
    assert jnp.allclose(potential_non_gated, ref_png, atol=5e-4, rtol=5e-4)

    print("KERNEL_OK")
</pallas_src>

<mosaic_0001>
module attributes {stable_mosaic.version = 11 : i64} {
  func.func @_pglu_b_kernel(%arg0: i32, %arg1: memref<8x128xbf16, #tpu.memory_space<vmem>>, %arg2: memref<8x128xf32, #tpu.memory_space<vmem>>, %arg3: memref<8x128xf32, #tpu.memory_space<vmem>>, %arg4: memref<128x384xbf16, #tpu.memory_space<vmem>>, %arg5: memref<128x256xbf16, #tpu.memory_space<vmem>>, %arg6: memref<128x128xbf16, #tpu.memory_space<vmem>>, %arg7: memref<1x384xf32, #tpu.memory_space<vmem>>, %arg8: memref<1x128xf32, #tpu.memory_space<vmem>>, %arg9: memref<1x128xf32, #tpu.memory_space<vmem>>, %arg10: memref<8x128xf32, #tpu.memory_space<vmem>>, %arg11: memref<8x128xf32, #tpu.memory_space<vmem>>) attributes {dimension_semantics = [#tpu.dimension_semantics<parallel>], iteration_bounds = array<i64: 1>, scalar_prefetch = 0 : i64, scratch_operands = 0 : i64, tpu.core_type = #tpu.core_type<tc>, window_params = [{transform_indices = @transform_0, window_bounds = array<i64: 8, 128>}, {transform_indices = @transform_1, window_bounds = array<i64: 8, 128>}, {transform_indices = @transform_2, window_bounds = array<i64: 8, 128>}, {pipeline_mode = #tpu.pipeline_mode<synchronous>, transform_indices = @transform_3, window_bounds = array<i64: 128, 384>}, {pipeline_mode = #tpu.pipeline_mode<synchronous>, transform_indices = @transform_4, window_bounds = array<i64: 128, 256>}, {pipeline_mode = #tpu.pipeline_mode<synchronous>, transform_indices = @transform_5, window_bounds = array<i64: 128, 128>}, {pipeline_mode = #tpu.pipeline_mode<synchronous>, transform_indices = @transform_6, window_bounds = array<i64: 1, 384>}, {pipeline_mode = #tpu.pipeline_mode<synchronous>, transform_indices = @transform_7, window_bounds = array<i64: 1, 128>}, {pipeline_mode = #tpu.pipeline_mode<synchronous>, transform_indices = @transform_8, window_bounds = array<i64: 1, 128>}, {transform_indices = @transform_9, window_bounds = array<i64: 8, 128>}, {transform_indices = @transform_10, window_bounds = array<i64: 8, 128>}]} {
    %c0 = arith.constant 0 : index
    %c0_0 = arith.constant 0 : index
    %0 = vector.load %arg1[%c0, %c0_0] : memref<8x128xbf16, #tpu.memory_space<vmem>>, vector<8x128xbf16>
    %c0_1 = arith.constant 0 : index
    %c0_2 = arith.constant 0 : index
    %1 = vector.load %arg2[%c0_1, %c0_2] : memref<8x128xf32, #tpu.memory_space<vmem>>, vector<8x128xf32>
    %2 = arith.truncf %1 : vector<8x128xf32> to vector<8x128xbf16>
    %c0_3 = arith.constant 0 : index
    %c0_4 = arith.constant 0 : index
    %3 = vector.load %arg4[%c0_3, %c0_4] : memref<128x384xbf16, #tpu.memory_space<vmem>>, vector<128x384xbf16>
    %cst = arith.constant dense<0.000000e+00> : vector<8x384xf32>
    %4 = tpu.matmul %0, %3, %cst {dimension_numbers = #tpu.dot_dimension_numbers<[1], [0], [0], [1], [0, 0, 1, 1], [], []>} : vector<8x128xbf16>, vector<128x384xbf16>, vector<8x384xf32> -> vector<8x384xf32>
    %c0_5 = arith.constant 0 : index
    %c0_6 = arith.constant 0 : index
    %5 = vector.load %arg7[%c0_5, %c0_6] : memref<1x384xf32, #tpu.memory_space<vmem>>, vector<1x384xf32>
    %6 = vector.broadcast %5 : vector<1x384xf32> to vector<8x384xf32>
    %7 = arith.addf %4, %6 : vector<8x384xf32>
    %c0_7 = arith.constant 0 : index
    %c0_8 = arith.constant 0 : index
    %8 = vector.load %arg5[%c0_7, %c0_8] : memref<128x256xbf16, #tpu.memory_space<vmem>>, vector<128x256xbf16>
    %cst_9 = arith.constant dense<0.000000e+00> : vector<8x256xf32>
    %9 = tpu.matmul %2, %8, %cst_9 {dimension_numbers = #tpu.dot_dimension_numbers<[1], [0], [0], [1], [0, 0, 1, 1], [], []>} : vector<8x128xbf16>, vector<128x256xbf16>, vector<8x256xf32> -> vector<8x256xf32>
    %10 = vector.extract_strided_slice %7 {offsets = [0, 0], sizes = [8, 128], strides = [1, 1]} : vector<8x384xf32> to vector<8x128xf32>
    %11 = vector.extract_strided_slice %9 {offsets = [0, 0], sizes = [8, 128], strides = [1, 1]} : vector<8x256xf32> to vector<8x128xf32>
    %12 = arith.addf %10, %11 : vector<8x128xf32>
    %cst_10 = arith.constant 5.000000e-01 : f32
    %13 = vector.broadcast %cst_10 : f32 to vector<8x128xf32>
    %14 = arith.mulf %13, %12 : vector<8x128xf32>
    %15 = math.tanh %14 : vector<8x128xf32>
    %cst_11 = arith.constant 1.000000e+00 : f32
    %16 = vector.broadcast %cst_11 : f32 to vector<8x128xf32>
    %17 = arith.addf %15, %16 : vector<8x128xf32>
    %cst_12 = arith.constant 5.000000e-01 : f32
    %18 = vector.broadcast %cst_12 : f32 to vector<8x128xf32>
    %19 = arith.mulf %18, %17 : vector<8x128xf32>
    %20 = vector.extract_strided_slice %7 {offsets = [0, 128], sizes = [8, 128], strides = [1, 1]} : vector<8x384xf32> to vector<8x128xf32>
    %21 = vector.extract_strided_slice %9 {offsets = [0, 128], sizes = [8, 128], strides = [1, 1]} : vector<8x256xf32> to vector<8x128xf32>
    %22 = arith.addf %20, %21 : vector<8x128xf32>
    %cst_13 = arith.constant 5.000000e-01 : f32
    %23 = vector.broadcast %cst_13 : f32 to vector<8x128xf32>
    %24 = arith.mulf %23, %22 : vector<8x128xf32>
    %25 = math.tanh %24 : vector<8x128xf32>
    %cst_14 = arith.constant 1.000000e+00 : f32
    %26 = vector.broadcast %cst_14 : f32 to vector<8x128xf32>
    %27 = arith.addf %25, %26 : vector<8x128xf32>
    %cst_15 = arith.constant 5.000000e-01 : f32
    %28 = vector.broadcast %cst_15 : f32 to vector<8x128xf32>
    %29 = arith.mulf %28, %27 : vector<8x128xf32>
    %30 = arith.mulf %19, %1 : vector<8x128xf32>
    %31 = arith.truncf %30 : vector<8x128xf32> to vector<8x128xbf16>
    %32 = vector.extract_strided_slice %7 {offsets = [0, 256], sizes = [8, 128], strides = [1, 1]} : vector<8x384xf32> to vector<8x128xf32>
    %c0_16 = arith.constant 0 : index
    %c0_17 = arith.constant 0 : index
    %33 = vector.load %arg6[%c0_16, %c0_17] : memref<128x128xbf16, #tpu.memory_space<vmem>>, vector<128x128xbf16>
    %cst_18 = arith.constant dense<0.000000e+00> : vector<8x128xf32>
    %34 = tpu.matmul %31, %33, %cst_18 {dimension_numbers = #tpu.dot_dimension_numbers<[1], [0], [0], [1], [0, 0, 1, 1], [], []>} : vector<8x128xbf16>, vector<128x128xbf16>, vector<8x128xf32> -> vector<8x128xf32>
    %35 = arith.addf %32, %34 : vector<8x128xf32>
    %36 = math.tanh %35 : vector<8x128xf32>
    %37 = arith.subf %36, %1 : vector<8x128xf32>
    %38 = arith.mulf %29, %37 : vector<8x128xf32>
    %39 = arith.addf %1, %38 : vector<8x128xf32>
    %c0_19 = arith.constant 0 : index
    %c0_20 = arith.constant 0 : index
    %40 = vector.load %arg3[%c0_19, %c0_20] : memref<8x128xf32, #tpu.memory_space<vmem>>, vector<8x128xf32>
    %41 = arith.addf %40, %39 : vector<8x128xf32>
    %c0_21 = arith.constant 0 : index
    %c0_22 = arith.constant 0 : index
    %42 = vector.load %arg8[%c0_21, %c0_22] : memref<1x128xf32, #tpu.memory_space<vmem>>, vector<1x128xf32>
    %43 = vector.broadcast %42 : vector<1x128xf32> to vector<8x128xf32>
    %44 = arith.cmpf ogt, %41, %43 : vector<8x128xf32>
    %cst_23 = arith.constant 0.000000e+00 : f32
    %45 = vector.broadcast %cst_23 : f32 to vector<8x128xf32>
    %46 = arith.select %44, %41, %45 : vector<8x128xi1>, vector<8x128xf32>
    %c0_24 = arith.constant 0 : index
    %c0_25 = arith.constant 0 : index
    %47 = vector.load %arg10[%c0_24, %c0_25] : memref<8x128xf32, #tpu.memory_space<vmem>>, vector<8x128xf32>
    tpu.vector_store %arg10[%c0_24, %c0_25], %46 {strides = array<i32>} : memref<8x128xf32, #tpu.memory_space<vmem>>, vector<8x128xf32>,
    %c0_26 = arith.constant 0 : index
    %c0_27 = arith.constant 0 : index
    %48 = vector.load %arg9[%c0_26, %c0_27] : memref<1x128xf32, #tpu.memory_space<vmem>>, vector<1x128xf32>
    %49 = vector.broadcast %48 : vector<1x128xf32> to vector<8x128xf32>
    %50 = arith.mulf %41, %49 : vector<8x128xf32>
    %cst_28 = arith.constant 0.000000e+00 : f32
    %51 = vector.broadcast %cst_28 : f32 to vector<8x128xf32>
    %52 = arith.select %44, %51, %50 : vector<8x128xi1>, vector<8x128xf32>
    %c0_29 = arith.constant 0 : index
    %c0_30 = arith.constant 0 : index
    %53 = vector.load %arg11[%c0_29, %c0_30] : memref<8x128xf32, #tpu.memory_space<vmem>>, vector<8x128xf32>
    tpu.vector_store %arg11[%c0_29, %c0_30], %52 {strides = array<i32>} : memref<8x128xf32, #tpu.memory_space<vmem>>, vector<8x128xf32>,
    return
  }
  func.func @transform_0(%arg0: i32) -> (i32, i32) {
    %c0_i32 = arith.constant 0 : i32
    %c0_i32_0 = arith.constant 0 : i32
    return %arg0, %c0_i32 : i32, i32
  }
  func.func @transform_1(%arg0: i32) -> (i32, i32) {
    %c0_i32 = arith.constant 0 : i32
    %c0_i32_0 = arith.constant 0 : i32
    return %arg0, %c0_i32 : i32, i32
  }
  func.func @transform_2(%arg0: i32) -> (i32, i32) {
    %c0_i32 = arith.constant 0 : i32
    %c0_i32_0 = arith.constant 0 : i32
    return %arg0, %c0_i32 : i32, i32
  }
  func.func @transform_3(%arg0: i32) -> (i32, i32) {
    %c0_i32 = arith.constant 0 : i32
    %c0_i32_0 = arith.constant 0 : i32
    %c0_i32_1 = arith.constant 0 : i32
    return %c0_i32, %c0_i32_0 : i32, i32
  }
  func.func @transform_4(%arg0: i32) -> (i32, i32) {
    %c0_i32 = arith.constant 0 : i32
    %c0_i32_0 = arith.constant 0 : i32
    %c0_i32_1 = arith.constant 0 : i32
    return %c0_i32, %c0_i32_0 : i32, i32
  }
  func.func @transform_5(%arg0: i32) -> (i32, i32) {
    %c0_i32 = arith.constant 0 : i32
    %c0_i32_0 = arith.constant 0 : i32
    %c0_i32_1 = arith.constant 0 : i32
    return %c0_i32, %c0_i32_0 : i32, i32
  }
  func.func @transform_6(%arg0: i32) -> (i32, i32) {
    %c0_i32 = arith.constant 0 : i32
    %c0_i32_0 = arith.constant 0 : i32
    %c0_i32_1 = arith.constant 0 : i32
    return %c0_i32, %c0_i32_0 : i32, i32
  }
  func.func @transform_7(%arg0: i32) -> (i32, i32) {
    %c0_i32 = arith.constant 0 : i32
    %c0_i32_0 = arith.constant 0 : i32
    %c0_i32_1 = arith.constant 0 : i32
    return %c0_i32, %c0_i32_0 : i32, i32
  }
  func.func @transform_8(%arg0: i32) -> (i32, i32) {
    %c0_i32 = arith.constant 0 : i32
    %c0_i32_0 = arith.constant 0 : i32
    %c0_i32_1 = arith.constant 0 : i32
    return %c0_i32, %c0_i32_0 : i32, i32
  }
  func.func @transform_9(%arg0: i32) -> (i32, i32) {
    %c0_i32 = arith.constant 0 : i32
    %c0_i32_0 = arith.constant 0 : i32
    return %arg0, %c0_i32 : i32, i32
  }
  func.func @transform_10(%arg0: i32) -> (i32, i32) {
    %c0_i32 = arith.constant 0 : i32
    %c0_i32_0 = arith.constant 0 : i32
    return %arg0, %c0_i32 : i32, i32
  }
}

module attributes {stable_mosaic.version = 11 : i64} {
  func.func @_pglu_b_kernel(%arg0: i32, %arg1: memref<8x128xbf16, #tpu.memory_space<vmem>>, %arg2: memref<8x128xf32, #tpu.memory_space<vmem>>, %arg3: memref<8x128xf32, #tpu.memory_space<vmem>>, %arg4: memref<128x384xbf16, #tpu.memory_space<vmem>>, %arg5: memref<128x256xbf16, #tpu.memory_space<vmem>>, %arg6: memref<128x128xbf16, #tpu.memory_space<vmem>>, %arg7: memref<1x384xf32, #tpu.memory_space<vmem>>, %arg8: memref<1x128xf32, #tpu.memory_space<vmem>>, %arg9: memref<1x128xf32, #tpu.memory_space<vmem>>, %arg10: memref<8x128xf32, #tpu.memory_space<vmem>>, %arg11: memref<8x128xf32, #tpu.memory_space<vmem>>) attributes {dimension_semantics = [#tpu.dimension_semantics<parallel>], iteration_bounds = array<i64: 1>, scalar_prefetch = 0 : i64, scratch_operands = 0 : i64, tpu.core_type = #tpu.core_type<tc>, window_params = [{transform_indices = @transform_0, window_bounds = array<i64: 8, 128>}, {transform_indices = @transform_1, window_bounds = array<i64: 8, 128>}, {transform_indices = @transform_2, window_bounds = array<i64: 8, 128>}, {pipeline_mode = #tpu.pipeline_mode<synchronous>, transform_indices = @transform_3, window_bounds = array<i64: 128, 384>}, {pipeline_mode = #tpu.pipeline_mode<synchronous>, transform_indices = @transform_4, window_bounds = array<i64: 128, 256>}, {pipeline_mode = #tpu.pipeline_mode<synchronous>, transform_indices = @transform_5, window_bounds = array<i64: 128, 128>}, {pipeline_mode = #tpu.pipeline_mode<synchronous>, transform_indices = @transform_6, window_bounds = array<i64: 1, 384>}, {pipeline_mode = #tpu.pipeline_mode<synchronous>, transform_indices = @transform_7, window_bounds = array<i64: 1, 128>}, {pipeline_mode = #tpu.pipeline_mode<synchronous>, transform_indices = @transform_8, window_bounds = array<i64: 1, 128>}, {transform_indices = @transform_9, window_bounds = array<i64: 8, 128>}, {transform_indices = @transform_10, window_bounds = array<i64: 8, 128>}]} {
    %c0 = arith.constant 0 : index
    %c0_0 = arith.constant 0 : index
    %0 = vector.load %arg1[%c0, %c0_0] : memref<8x128xbf16, #tpu.memory_space<vmem>>, vector<8x128xbf16>
    %c0_1 = arith.constant 0 : index
    %c0_2 = arith.constant 0 : index
    %1 = vector.load %arg2[%c0_1, %c0_2] : memref<8x128xf32, #tpu.memory_space<vmem>>, vector<8x128xf32>
    %2 = arith.truncf %1 : vector<8x128xf32> to vector<8x128xbf16>
    %c0_3 = arith.constant 0 : index
    %c0_4 = arith.constant 0 : index
    %3 = vector.load %arg4[%c0_3, %c0_4] : memref<128x384xbf16, #tpu.memory_space<vmem>>, vector<128x384xbf16>
    %cst = arith.constant dense<0.000000e+00> : vector<8x384xf32>
    %4 = tpu.matmul %0, %3, %cst {dimension_numbers = #tpu.dot_dimension_numbers<[1], [0], [0], [1], [0, 0, 1, 1], [], []>} : vector<8x128xbf16>, vector<128x384xbf16>, vector<8x384xf32> -> vector<8x384xf32>
    %c0_5 = arith.constant 0 : index
    %c0_6 = arith.constant 0 : index
    %5 = vector.load %arg7[%c0_5, %c0_6] : memref<1x384xf32, #tpu.memory_space<vmem>>, vector<1x384xf32>
    %6 = vector.broadcast %5 : vector<1x384xf32> to vector<8x384xf32>
    %7 = arith.addf %4, %6 : vector<8x384xf32>
    %c0_7 = arith.constant 0 : index
    %c0_8 = arith.constant 0 : index
    %8 = vector.load %arg5[%c0_7, %c0_8] : memref<128x256xbf16, #tpu.memory_space<vmem>>, vector<128x256xbf16>
    %cst_9 = arith.constant dense<0.000000e+00> : vector<8x256xf32>
    %9 = tpu.matmul %2, %8, %cst_9 {dimension_numbers = #tpu.dot_dimension_numbers<[1], [0], [0], [1], [0, 0, 1, 1], [], []>} : vector<8x128xbf16>, vector<128x256xbf16>, vector<8x256xf32> -> vector<8x256xf32>
    %10 = vector.extract_strided_slice %7 {offsets = [0, 0], sizes = [8, 128], strides = [1, 1]} : vector<8x384xf32> to vector<8x128xf32>
    %11 = vector.extract_strided_slice %9 {offsets = [0, 0], sizes = [8, 128], strides = [1, 1]} : vector<8x256xf32> to vector<8x128xf32>
    %12 = arith.addf %10, %11 : vector<8x128xf32>
    %cst_10 = arith.constant 5.000000e-01 : f32
    %13 = vector.broadcast %cst_10 : f32 to vector<8x128xf32>
    %14 = arith.mulf %13, %12 : vector<8x128xf32>
    %15 = math.tanh %14 : vector<8x128xf32>
    %cst_11 = arith.constant 1.000000e+00 : f32
    %16 = vector.broadcast %cst_11 : f32 to vector<8x128xf32>
    %17 = arith.addf %15, %16 : vector<8x128xf32>
    %cst_12 = arith.constant 5.000000e-01 : f32
    %18 = vector.broadcast %cst_12 : f32 to vector<8x128xf32>
    %19 = arith.mulf %18, %17 : vector<8x128xf32>
    %20 = vector.extract_strided_slice %7 {offsets = [0, 128], sizes = [8, 128], strides = [1, 1]} : vector<8x384xf32> to vector<8x128xf32>
    %21 = vector.extract_strided_slice %9 {offsets = [0, 128], sizes = [8, 128], strides = [1, 1]} : vector<8x256xf32> to vector<8x128xf32>
    %22 = arith.addf %20, %21 : vector<8x128xf32>
    %cst_13 = arith.constant 5.000000e-01 : f32
    %23 = vector.broadcast %cst_13 : f32 to vector<8x128xf32>
    %24 = arith.mulf %23, %22 : vector<8x128xf32>
    %25 = math.tanh %24 : vector<8x128xf32>
    %cst_14 = arith.constant 1.000000e+00 : f32
    %26 = vector.broadcast %cst_14 : f32 to vector<8x128xf32>
    %27 = arith.addf %25, %26 : vector<8x128xf32>
    %cst_15 = arith.constant 5.000000e-01 : f32
    %28 = vector.broadcast %cst_15 : f32 to vector<8x128xf32>
    %29 = arith.mulf %28, %27 : vector<8x128xf32>
    %30 = arith.mulf %19, %1 : vector<8x128xf32>
    %31 = arith.truncf %30 : vector<8x128xf32> to vector<8x128xbf16>
    %32 = vector.extract_strided_slice %7 {offsets = [0, 256], sizes = [8, 128], strides = [1, 1]} : vector<8x384xf32> to vector<8x128xf32>
    %c0_16 = arith.constant 0 : index
    %c0_17 = arith.constant 0 : index
    %33 = vector.load %arg6[%c0_16, %c0_17] : memref<128x128xbf16, #tpu.memory_space<vmem>>, vector<128x128xbf16>
    %cst_18 = arith.constant dense<0.000000e+00> : vector<8x128xf32>
    %34 = tpu.matmul %31, %33, %cst_18 {dimension_numbers = #tpu.dot_dimension_numbers<[1], [0], [0], [1], [0, 0, 1, 1], [], []>} : vector<8x128xbf16>, vector<128x128xbf16>, vector<8x128xf32> -> vector<8x128xf32>
    %35 = arith.addf %32, %34 : vector<8x128xf32>
    %36 = math.tanh %35 : vector<8x128xf32>
    %37 = arith.subf %36, %1 : vector<8x128xf32>
    %38 = arith.mulf %29, %37 : vector<8x128xf32>
    %39 = arith.addf %1, %38 : vector<8x128xf32>
    %c0_19 = arith.constant 0 : index
    %c0_20 = arith.constant 0 : index
    %40 = vector.load %arg3[%c0_19, %c0_20] : memref<8x128xf32, #tpu.memory_space<vmem>>, vector<8x128xf32>
    %41 = arith.addf %40, %39 : vector<8x128xf32>
    %c0_21 = arith.constant 0 : index
    %c0_22 = arith.constant 0 : index
    %42 = vector.load %arg8[%c0_21, %c0_22] : memref<1x128xf32, #tpu.memory_space<vmem>>, vector<1x128xf32>
    %43 = vector.broadcast %42 : vector<1x128xf32> to vector<8x128xf32>
    %44 = arith.cmpf ogt, %41, %43 : vector<8x128xf32>
    %cst_23 = arith.constant 0.000000e+00 : f32
    %45 = vector.broadcast %cst_23 : f32 to vector<8x128xf32>
    %46 = arith.select %44, %41, %45 : vector<8x128xi1>, vector<8x128xf32>
    %c0_24 = arith.constant 0 : index
    %c0_25 = arith.constant 0 : index
    %47 = vector.load %arg10[%c0_24, %c0_25] : memref<8x128xf32, #tpu.memory_space<vmem>>, vector<8x128xf32>
    tpu.vector_store %arg10[%c0_24, %c0_25], %46 {strides = array<i32>} : memref<8x128xf32, #tpu.memory_space<vmem>>, vector<8x128xf32>,
    %c0_26 = arith.constant 0 : index
    %c0_27 = arith.constant 0 : index
    %48 = vector.load %arg9[%c0_26, %c0_27] : memref<1x128xf32, #tpu.memory_space<vmem>>, vector<1x128xf32>
    %49 = vector.broadcast %48 : vector<1x128xf32> to vector<8x128xf32>
    %50 = arith.mulf %41, %49 : vector<8x128xf32>
    %cst_28 = arith.constant 0.000000e+00 : f32
    %51 = vector.broadcast %cst_28 : f32 to vector<8x128xf32>
    %52 = arith.select %44, %51, %50 : vector<8x128xi1>, vector<8x128xf32>
    %c0_29 = arith.constant 0 : index
    %c0_30 = arith.constant 0 : index
    %53 = vector.load %arg11[%c0_29, %c0_30] : memref<8x128xf32, #tpu.memory_space<vmem>>, vector<8x128xf32>
    tpu.vector_store %arg11[%c0_29, %c0_30], %52 {strides = array<i32>} : memref<8x128xf32, #tpu.memory_space<vmem>>, vector<8x128xf32>,
    return
  }
  func.func @transform_0(%arg0: i32) -> (i32, i32) {
    %c0_i32 = arith.constant 0 : i32
    %c0_i32_0 = arith.constant 0 : i32
    return %arg0, %c0_i32 : i32, i32
  }
  func.func @transform_1(%arg0: i32) -> (i32, i32) {
    %c0_i32 = arith.constant 0 : i32
    %c0_i32_0 = arith.constant 0 : i32
    return %arg0, %c0_i32 : i32, i32
  }
  func.func @transform_2(%arg0: i32) -> (i32, i32) {
    %c0_i32 = arith.constant 0 : i32
    %c0_i32_0 = arith.constant 0 : i32
    return %arg0, %c0_i32 : i32, i32
  }
  func.func @transform_3(%arg0: i32) -> (i32, i32) {
    %c0_i32 = arith.constant 0 : i32
    %c0_i32_0 = arith.constant 0 : i32
    %c0_i32_1 = arith.constant 0 : i32
    return %c0_i32, %c0_i32_0 : i32, i32
  }
  func.func @transform_4(%arg0: i32) -> (i32, i32) {
    %c0_i32 = arith.constant 0 : i32
    %c0_i32_0 = arith.constant 0 : i32
    %c0_i32_1 = arith.constant 0 : i32
    return %c0_i32, %c0_i32_0 : i32, i32
  }
  func.func @transform_5(%arg0: i32) -> (i32, i32) {
    %c0_i32 = arith.constant 0 : i32
    %c0_i32_0 = arith.constant 0 : i32
    %c0_i32_1 = arith.constant 0 : i32
    return %c0_i32, %c0_i32_0 : i32, i32
  }
  func.func @transform_6(%arg0: i32) -> (i32, i32) {
    %c0_i32 = arith.constant 0 : i32
    %c0_i32_0 = arith.constant 0 : i32
    %c0_i32_1 = arith.constant 0 : i32
    return %c0_i32, %c0_i32_0 : i32, i32
  }
  func.func @transform_7(%arg0: i32) -> (i32, i32) {
    %c0_i32 = arith.constant 0 : i32
    %c0_i32_0 = arith.constant 0 : i32
    %c0_i32_1 = arith.constant 0 : i32
    return %c0_i32, %c0_i32_0 : i32, i32
  }
  func.func @transform_8(%arg0: i32) -> (i32, i32) {
    %c0_i32 = arith.constant 0 : i32
    %c0_i32_0 = arith.constant 0 : i32
    %c0_i32_1 = arith.constant 0 : i32
    return %c0_i32, %c0_i32_0 : i32, i32
  }
  func.func @transform_9(%arg0: i32) -> (i32, i32) {
    %c0_i32 = arith.constant 0 : i32
    %c0_i32_0 = arith.constant 0 : i32
    return %arg0, %c0_i32 : i32, i32
  }
  func.func @transform_10(%arg0: i32) -> (i32, i32) {
    %c0_i32 = arith.constant 0 : i32
    %c0_i32_0 = arith.constant 0 : i32
    return %arg0, %c0_i32 : i32, i32
  }
}

</mosaic_0001>

<llo_original>
// kernel: tpu_custom_call.1
$region0: #{tpu_custom_call.1}
  #allocation0 [shape = 'u32[]', space=smem, size = 0x4, offset = 0x4, fixed_abs, tag = 'smem constant byte address 0x4 - core index']
  #allocation1 [shape = 'u32[144,128]{1,0:T(1,128)}', space=vmem, size = 0x12000, scoped, tag = 'internal scratch']
  %s0 = inlined_call_operand.hbm [shape: bf16[8,128], index: 0, kind: input, shape index: {}]
  %s1 = inlined_call_operand.hbm [shape: f32[8,128], index: 1, kind: input, shape index: {}]
  %s2 = inlined_call_operand.hbm [shape: f32[8,128], index: 2, kind: input, shape index: {}, may-alias: {2,10}]
  %s3 = inlined_call_operand.hbm [shape: bf16[128,384], index: 3, kind: input, shape index: {}]
  %s4 = inlined_call_operand.hbm [shape: bf16[128,256], index: 4, kind: input, shape index: {}]
  %s5 = inlined_call_operand.hbm [shape: bf16[128,128], index: 5, kind: input, shape index: {}]
  %s6 = inlined_call_operand.hbm [shape: f32[1,384], index: 6, kind: input, shape index: {}]
  %s7 = inlined_call_operand.hbm [shape: f32[1,128], index: 7, kind: input, shape index: {}]
  %s8 = inlined_call_operand.hbm [shape: f32[1,128], index: 8, kind: input, shape index: {}]
  %s9 = inlined_call_operand.hbm [shape: f32[8,128], index: 9, kind: output, shape index: {0}]
  %s10 = inlined_call_operand.hbm [shape: f32[8,128], index: 10, kind: output, shape index: {1}, may-alias: {2,10}]
  %11 = xla_tuple %s9, %s10
  %s12 = sld [smem:[#allocation0]]
  $region90: #{tpu_custom_call.1} parent=0
    _
  %s14 = ssub.s32 1, %s12
  %s15 = scalar_select 0, %s14, %s12
  $region1: #{tpu_custom_call.1} parent=0
    #allocation2 [shape = 'u8[2048]{0}', space=vmem, size = 0x800, scoped, tag = 'input window, operand 0, single buffered']
    #allocation3 [shape = 's32[1]{0}', space=sflag, size = 0x4, scoped, tag = 'scoped memory for tpu_custom_call.1']
    #allocation4 [shape = 's32[1]{0}', space=sflag, size = 0x4, scoped, tag = 'scoped memory for tpu_custom_call.1']
    #allocation5 [shape = 'u8[4096]{0}', space=vmem, size = 0x1000, scoped, tag = 'input window, operand 1, single buffered']
    #allocation6 [shape = 's32[1]{0}', space=sflag, size = 0x4, scoped, tag = 'scoped memory for tpu_custom_call.1']
    #allocation7 [shape = 'u8[4096]{0}', space=vmem, size = 0x1000, scoped, tag = 'input window, operand 2, single buffered']
    #allocation8 [shape = 'u8[98304]{0}', space=vmem, size = 0x18000, scoped, tag = 'input window, operand 3, single buffered']
    #allocation9 [shape = 's32[1]{0}', space=sflag, size = 0x4, scoped, tag = 'scoped memory for tpu_custom_call.1']
    #allocation10 [shape = 'u8[65536]{0}', space=vmem, size = 0x10000, scoped, tag = 'input window, operand 4, single buffered']
    #allocation11 [shape = 'u8[32768]{0}', space=vmem, size = 0x8000, scoped, tag = 'input window, operand 5, single buffered']
    #allocation12 [shape = 's32[1]{0}', space=sflag, size = 0x4, scoped, tag = 'scoped memory for tpu_custom_call.1']
    #allocation13 [shape = 'u8[1536]{0}', space=vmem, size = 0x800, scoped, tag = 'input window, operand 6, single buffered']
    #allocation14 [shape = 'u8[512]{0}', space=vmem, size = 0x400, scoped, tag = 'input window, operand 7, single buffered']
    #allocation15 [shape = 's32[1]{0}', space=sflag, size = 0x4, scoped, tag = 'scoped memory for tpu_custom_call.1']
    #allocation16 [shape = 'u8[512]{0}', space=vmem, size = 0x400, scoped, tag = 'input window, operand 8, single buffered']
    #allocation17 [shape = 'u8[4096]{0}', space=vmem, size = 0x1000, scoped, tag = 'output window, operand 0, single buffered']
    #allocation18 [shape = 'u8[4096]{0}', space=vmem, size = 0x1000, scoped, tag = 'output window, operand 1, single buffered']
    #allocation19 [shape = 's32[1]{0}', space=sflag, size = 0x4, scoped, tag = 'scoped memory for tpu_custom_call.1']
    %16 = vsyncpa [#allocation3], 0
    %17 = vsyncpa [#allocation6], 0
    %18 = vsyncpa [#allocation9], 0
    %19 = vsyncpa [#allocation12], 0
    %20 = vsyncpa [#allocation15], 0
    %21 = vsyncpa [#allocation4], 0
    %22 = vsyncpa [#allocation19], 0
    // Predicated region
    $region2: #{tpu_custom_call.1} parent=1 // pred_check
      _
    $region3: #{tpu_custom_call.1} parent=1 // pred_check_branch
      %24 = sbr.rel (0) target = $region5
    $region4: #{tpu_custom_call.1} parent=1 // pred_region
      %s26 = ssub.s32 64, 64
      %27 = vsyncadd [#allocation3], %s26
      %s29 = sshll.u32 [#allocation2], 4
      %s30 = int_to_ptr.vmem [resolvable:$true] %s29
      %32 = dma.hbm_to_vmem [thread:$0]  %s0, 64, %s30, [#allocation3]
    $region5: #{tpu_custom_call.1} parent=1 // pred_fallthru
      _
    // Predicated region
    $region6: #{tpu_custom_call.1} parent=1 // pred_check
      _
    $region7: #{tpu_custom_call.1} parent=1 // pred_check_branch
      %34 = sbr.rel (0) target = $region9
    $region8: #{tpu_custom_call.1} parent=1 // pred_region
      %s36 = ssub.s32 128, 128
      %37 = vsyncadd [#allocation6], %s36
      %s39 = sshll.u32 [#allocation5], 4
      %s40 = int_to_ptr.vmem [resolvable:$true] %s39
      %42 = dma.hbm_to_vmem [thread:$0]  %s1, 128, %s40, [#allocation6]
    $region9: #{tpu_custom_call.1} parent=1 // pred_fallthru
      _
    // Predicated region
    $region10: #{tpu_custom_call.1} parent=1 // pred_check
      _
    $region11: #{tpu_custom_call.1} parent=1 // pred_check_branch
      %44 = sbr.rel (0) target = $region13
    $region12: #{tpu_custom_call.1} parent=1 // pred_region
      %s46 = ssub.s32 128, 128
      %47 = vsyncadd [#allocation6], %s46
      %s49 = sshll.u32 [#allocation7], 4
      %s50 = int_to_ptr.vmem [resolvable:$true] %s49
      %52 = dma.hbm_to_vmem [thread:$0]  %s2, 128, %s50, [#allocation6]
    $region13: #{tpu_custom_call.1} parent=1 // pred_fallthru
      _
    // Predicated region
    $region14: #{tpu_custom_call.1} parent=1 // pred_check
      _
    $region15: #{tpu_custom_call.1} parent=1 // pred_check_branch
      %54 = sbr.rel (0) target = $region17
    $region16: #{tpu_custom_call.1} parent=1 // pred_region
      %s56 = ssub.s32 3072, 3072
      %57 = vsyncadd [#allocation9], %s56
      %s58 = sshll.u32 [#allocation8], 4
      %s59 = int_to_ptr.vmem [resolvable:$true] %s58
      %64 = dma.hbm_to_vmem [thread:$0]  %s3, 3072, %s59, [#allocation9], 192, 192, 12
    $region17: #{tpu_custom_call.1} parent=1 // pred_fallthru
      _
    // Predicated region
    $region18: #{tpu_custom_call.1} parent=1 // pred_check
      _
    $region19: #{tpu_custom_call.1} parent=1 // pred_check_branch
      %66 = sbr.rel (0) target = $region21
    $region20: #{tpu_custom_call.1} parent=1 // pred_region
      %s68 = ssub.s32 2048, 2048
      %69 = vsyncadd [#allocation9], %s68
      %s70 = sshll.u32 [#allocation10], 4
      %s71 = int_to_ptr.vmem [resolvable:$true] %s70
      %76 = dma.hbm_to_vmem [thread:$0]  %s4, 2048, %s71, [#allocation9], 128, 128, 8
    $region21: #{tpu_custom_call.1} parent=1 // pred_fallthru
      _
    // Predicated region
    $region22: #{tpu_custom_call.1} parent=1 // pred_check
      _
    $region23: #{tpu_custom_call.1} parent=1 // pred_check_branch
      %78 = sbr.rel (0) target = $region25
    $region24: #{tpu_custom_call.1} parent=1 // pred_region
      %s80 = ssub.s32 1024, 1024
      %81 = vsyncadd [#allocation12], %s80
      %s82 = sshll.u32 [#allocation11], 4
      %s83 = int_to_ptr.vmem [resolvable:$true] %s82
      %88 = dma.hbm_to_vmem [thread:$0]  %s5, 1024, %s83, [#allocation12], 64, 64, 4
    $region25: #{tpu_custom_call.1} parent=1 // pred_fallthru
      _
    // Predicated region
    $region26: #{tpu_custom_call.1} parent=1 // pred_check
      _
    $region27: #{tpu_custom_call.1} parent=1 // pred_check_branch
      %90 = sbr.rel (0) target = $region29
    $region28: #{tpu_custom_call.1} parent=1 // pred_region
      %s92 = ssub.s32 48, 48
      %93 = vsyncadd [#allocation12], %s92
      %s95 = sshll.u32 [#allocation13], 4
      %s96 = int_to_ptr.vmem [resolvable:$true] %s95
      %98 = dma.hbm_to_vmem [thread:$0]  %s6, 48, %s96, [#allocation12]
    $region29: #{tpu_custom_call.1} parent=1 // pred_fallthru
      _
    // Predicated region
    $region30: #{tpu_custom_call.1} parent=1 // pred_check
      _
    $region31: #{tpu_custom_call.1} parent=1 // pred_check_branch
      %100 = sbr.rel (0) target = $region33
    $region32: #{tpu_custom_call.1} parent=1 // pred_region
      %s102 = ssub.s32 16, 16
      %103 = vsyncadd [#allocation15], %s102
      %s105 = sshll.u32 [#allocation14], 4
      %s106 = int_to_ptr.vmem [resolvable:$true] %s105
      %108 = dma.hbm_to_vmem [thread:$0]  %s7, 16, %s106, [#allocation15]
    $region33: #{tpu_custom_call.1} parent=1 // pred_fallthru
      _
    // Predicated region
    $region34: #{tpu_custom_call.1} parent=1 // pred_check
      _
    $region35: #{tpu_custom_call.1} parent=1 // pred_check_branch
      %110 = sbr.rel (0) target = $region37
    $region36: #{tpu_custom_call.1} parent=1 // pred_region
      %s112 = ssub.s32 16, 16
      %113 = vsyncadd [#allocation15], %s112
      %s115 = sshll.u32 [#allocation16], 4
      %s116 = int_to_ptr.vmem [resolvable:$true] %s115
      %118 = dma.hbm_to_vmem [thread:$0]  %s8, 16, %s116, [#allocation15]
    $region37: #{tpu_custom_call.1} parent=1 // pred_fallthru
      _
    // Predicated region
    $region38: #{tpu_custom_call.1} parent=1 // pred_check
      _
    $region39: #{tpu_custom_call.1} parent=1 // pred_check_branch
      %120 = sbr.rel (0) target = $region41
    $region40: #{tpu_custom_call.1} parent=1 // pred_region
      %121 = dma.done [#allocation3], 64
    $region41: #{tpu_custom_call.1} parent=1 // pred_fallthru
      _
    // Predicated region
    $region42: #{tpu_custom_call.1} parent=1 // pred_check
      _
    $region43: #{tpu_custom_call.1} parent=1 // pred_check_branch
      %123 = sbr.rel (0) target = $region45
    $region44: #{tpu_custom_call.1} parent=1 // pred_region
      %124 = dma.done [#allocation6], 128
    $region45: #{tpu_custom_call.1} parent=1 // pred_fallthru
      _
    // Predicated region
    $region46: #{tpu_custom_call.1} parent=1 // pred_check
      _
    $region47: #{tpu_custom_call.1} parent=1 // pred_check_branch
      %126 = sbr.rel (0) target = $region49
    $region48: #{tpu_custom_call.1} parent=1 // pred_region
      %127 = dma.done [#allocation6], 128
    $region49: #{tpu_custom_call.1} parent=1 // pred_fallthru
      _
    // Predicated region
    $region50: #{tpu_custom_call.1} parent=1 // pred_check
      _
    $region51: #{tpu_custom_call.1} parent=1 // pred_check_branch
      %129 = sbr.rel (0) target = $region53
    $region52: #{tpu_custom_call.1} parent=1 // pred_region
      %130 = dma.done [#allocation9], 3072
    $region53: #{tpu_custom_call.1} parent=1 // pred_fallthru
      _
    // Predicated region
    $region54: #{tpu_custom_call.1} parent=1 // pred_check
      _
    $region55: #{tpu_custom_call.1} parent=1 // pred_check_branch
      %132 = sbr.rel (0) target = $region57
    $region56: #{tpu_custom_call.1} parent=1 // pred_region
      %133 = dma.done [#allocation9], 2048
    $region57: #{tpu_custom_call.1} parent=1 // pred_fallthru
      _
    // Predicated region
    $region58: #{tpu_custom_call.1} parent=1 // pred_check
      _
    $region59: #{tpu_custom_call.1} parent=1 // pred_check_branch
      %135 = sbr.rel (0) target = $region61
    $region60: #{tpu_custom_call.1} parent=1 // pred_region
      %136 = dma.done [#allocation12], 1024
    $region61: #{tpu_custom_call.1} parent=1 // pred_fallthru
      _
    // Predicated region
    $region62: #{tpu_custom_call.1} parent=1 // pred_check
      _
    $region63: #{tpu_custom_call.1} parent=1 // pred_check_branch
      %138 = sbr.rel (0) target = $region65
    $region64: #{tpu_custom_call.1} parent=1 // pred_region
      %139 = dma.done [#allocation12], 48
    $region65: #{tpu_custom_call.1} parent=1 // pred_fallthru
      _
    // Predicated region
    $region66: #{tpu_custom_call.1} parent=1 // pred_check
      _
    $region67: #{tpu_custom_call.1} parent=1 // pred_check_branch
      %141 = sbr.rel (0) target = $region69
    $region68: #{tpu_custom_call.1} parent=1 // pred_region
      %142 = dma.done [#allocation15], 16
    $region69: #{tpu_custom_call.1} parent=1 // pred_fallthru
      _
    // Predicated region
    $region70: #{tpu_custom_call.1} parent=1 // pred_check
      _
    $region71: #{tpu_custom_call.1} parent=1 // pred_check_branch
      %144 = sbr.rel (0) target = $region73
    $region72: #{tpu_custom_call.1} parent=1 // pred_region
      %145 = dma.done [#allocation15], 16
    $region73: #{tpu_custom_call.1} parent=1 // pred_fallthru
      _
    %v147 = vld [vmem:[#allocation2] sm:$0xf]
    %v148 = vld [vmem:[#allocation5] sm:$0xff]
    %v149 = vpack.c.bf16 %v148, %v148
    %v150 = vld [vmem:[#allocation8] sm:$0xff]
    %v151 = vld [vmem:[#allocation8 + $0x8] sm:$0xf]
    %v152 = vld [vmem:[#allocation8 + $0xc] sm:$0xff]
    %v153 = vld [vmem:[#allocation8 + $0x14] sm:$0xf]
    %v154 = vld [vmem:[#allocation8 + $0x18] sm:$0xff]
    %v155 = vld [vmem:[#allocation8 + $0x20] sm:$0xf]
    %v156 = vld [vmem:[#allocation8 + $0x24] sm:$0xff]
    %v157 = vld [vmem:[#allocation8 + $0x2c] sm:$0xf]
    %v158 = vld [vmem:[#allocation8 + $0x30] sm:$0xff]
    %v159 = vld [vmem:[#allocation8 + $0x38] sm:$0xf]
    %v160 = vld [vmem:[#allocation8 + $0x3c] sm:$0xff]
    %v161 = vld [vmem:[#allocation8 + $0x44] sm:$0xf]
    %v162 = vld [vmem:[#allocation8 + $0x48] sm:$0xff]
    %v163 = vld [vmem:[#allocation8 + $0x50] sm:$0xf]
    %v164 = vld [vmem:[#allocation8 + $0x54] sm:$0xff]
    %v165 = vld [vmem:[#allocation8 + $0x5c] sm:$0xf]
    %v166 = vld [vmem:[#allocation8 + $0x60] sm:$0xff]
    %v167 = vld [vmem:[#allocation8 + $0x68] sm:$0xf]
    %v168 = vld [vmem:[#allocation8 + $0x6c] sm:$0xff]
    %v169 = vld [vmem:[#allocation8 + $0x74] sm:$0xf]
    %v170 = vld [vmem:[#allocation8 + $0x78] sm:$0xff]
    %v171 = vld [vmem:[#allocation8 + $0x80] sm:$0xf]
    %v172 = vld [vmem:[#allocation8 + $0x84] sm:$0xff]
    %v173 = vld [vmem:[#allocation8 + $0x8c] sm:$0xf]
    %v174 = vld [vmem:[#allocation8 + $0x90] sm:$0xff]
    %v175 = vld [vmem:[#allocation8 + $0x98] sm:$0xf]
    %v176 = vld [vmem:[#allocation8 + $0x9c] sm:$0xff]
    %v177 = vld [vmem:[#allocation8 + $0xa4] sm:$0xf]
    %v178 = vld [vmem:[#allocation8 + $0xa8] sm:$0xff]
    %v179 = vld [vmem:[#allocation8 + $0xb0] sm:$0xf]
    %v180 = vld [vmem:[#allocation8 + $0xb4] sm:$0xff]
    %v181 = vld [vmem:[#allocation8 + $0xbc] sm:$0xf]
    %v182 = vld [vmem:[#allocation13] sm:$0x7]
    %v184 = vlaneseq
    %v185 = vshrl.u32 %v184, 7
    %v186 = vsub.s32 0, %v185
    %v187 = vrot.slane %v182, %v186
    %v188 = vlaneseq
    %v189 = vshrl.u32 %v188, 7
    %v190 = vsub.s32 1, %v189
    %v191 = vrot.slane %v182, %v190
    %v192 = vlaneseq
    %v193 = vshrl.u32 %v192, 7
    %v194 = vsub.s32 2, %v193
    %v195 = vrot.slane %v182, %v194
    %v231 = vunpack.c.l.b16 %v150
    %v232 = vunpack.c.h.b16 %v150
    %v233 = vunpack.c.l.b16 %v151
    %v234 = vunpack.c.l.b16 %v152
    %v235 = vunpack.c.h.b16 %v152
    %v236 = vunpack.c.l.b16 %v153
    %v237 = vunpack.c.l.b16 %v154
    %v238 = vunpack.c.h.b16 %v154
    %v239 = vunpack.c.l.b16 %v155
    %v240 = vunpack.c.l.b16 %v156
    %v241 = vunpack.c.h.b16 %v156
    %v242 = vunpack.c.l.b16 %v157
    %v243 = vunpack.c.l.b16 %v158
    %v244 = vunpack.c.h.b16 %v158
    %v245 = vunpack.c.l.b16 %v159
    %v246 = vunpack.c.l.b16 %v160
    %v247 = vunpack.c.h.b16 %v160
    %v248 = vunpack.c.l.b16 %v161
    %v249 = vunpack.c.l.b16 %v162
    %v250 = vunpack.c.h.b16 %v162
    %v251 = vunpack.c.l.b16 %v163
    %v252 = vunpack.c.l.b16 %v164
    %v253 = vunpack.c.h.b16 %v164
    %v254 = vunpack.c.l.b16 %v165
    %v255 = vunpack.c.l.b16 %v166
    %v256 = vunpack.c.h.b16 %v166
    %v257 = vunpack.c.l.b16 %v167
    %v258 = vunpack.c.l.b16 %v168
    %v259 = vunpack.c.h.b16 %v168
    %v260 = vunpack.c.l.b16 %v169
    %v261 = vunpack.c.l.b16 %v170
    %v262 = vunpack.c.h.b16 %v170
    %v263 = vunpack.c.l.b16 %v171
    %v264 = vunpack.c.l.b16 %v172
    %v265 = vunpack.c.h.b16 %v172
    %v266 = vunpack.c.l.b16 %v173
    %v267 = vunpack.c.l.b16 %v174
    %v268 = vunpack.c.h.b16 %v174
    %v269 = vunpack.c.l.b16 %v175
    %v270 = vunpack.c.l.b16 %v176
    %v271 = vunpack.c.h.b16 %v176
    %v272 = vunpack.c.l.b16 %v177
    %v273 = vunpack.c.l.b16 %v178
    %v274 = vunpack.c.h.b16 %v178
    %v275 = vunpack.c.l.b16 %v179
    %v276 = vunpack.c.l.b16 %v180
    %v277 = vunpack.c.h.b16 %v180
    %v278 = vunpack.c.l.b16 %v181
    %v279 = vpack.c.b16 %v234, %v231
    %v280 = vpack.c.b16 %v235, %v232
    %v281 = vpack.c.b16 %v236, %v233
    %v282 = vpack.c.b16 %v240, %v237
    %v283 = vpack.c.b16 %v241, %v238
    %v284 = vpack.c.b16 %v242, %v239
    %v285 = vpack.c.b16 %v246, %v243
    %v286 = vpack.c.b16 %v247, %v244
    %v287 = vpack.c.b16 %v248, %v245
    %v288 = vpack.c.b16 %v252, %v249
    %v289 = vpack.c.b16 %v253, %v250
    %v290 = vpack.c.b16 %v254, %v251
    %v291 = vpack.c.b16 %v258, %v255
    %v292 = vpack.c.b16 %v259, %v256
    %v293 = vpack.c.b16 %v260, %v257
    %v294 = vpack.c.b16 %v264, %v261
    %v295 = vpack.c.b16 %v265, %v262
    %v296 = vpack.c.b16 %v266, %v263
    %v297 = vpack.c.b16 %v270, %v267
    %v298 = vpack.c.b16 %v271, %v268
    %v299 = vpack.c.b16 %v272, %v269
    %v300 = vpack.c.b16 %v276, %v273
    %v301 = vpack.c.b16 %v277, %v274
    %v302 = vpack.c.b16 %v278, %v275
    %327 = vmatprep.subr.bf16.mxu0 %v280
    %328 = vmatpush1.bf16.msra.mxu0 %v279
    %329 = vmatprep.subr.bf16.mxu0 %v283
    %330 = vmatpush1.bf16.msra.mxu0 %v282
    %331 = vmatprep.subr.bf16.mxu0 %v286
    %332 = vmatpush1.bf16.msra.mxu0 %v285
    %333 = vmatprep.subr.bf16.mxu0 %v289
    %334 = vmatpush1.bf16.msra.mxu0 %v288
    %335 = vmatprep.subr.bf16.mxu0 %v292
    %336 = vmatpush1.bf16.msra.mxu0 %v291
    %337 = vmatprep.subr.bf16.mxu0 %v295
    %338 = vmatpush1.bf16.msra.mxu0 %v294
    %339 = vmatprep.subr.bf16.mxu0 %v298
    %340 = vmatpush1.bf16.msra.mxu0 %v297
    %341 = vmatprep.subr.bf16.mxu0 %v301
    %342 = vmatpush1.bf16.msra.mxu0 %v300
    %343 = vmatprep.subr.bf16.mxu0 0
    %344 = vmatpush1.bf16.msra.mxu0 0
    %345 = vmatprep.subr.bf16.mxu0 0
    %346 = vmatpush1.bf16.msra.mxu0 0
    %347 = vmatprep.subr.bf16.mxu0 0
    %348 = vmatpush1.bf16.msra.mxu0 0
    %349 = vmatprep.subr.bf16.mxu0 0
    %350 = vmatpush1.bf16.msra.mxu0 0
    %351 = vmatprep.subr.bf16.mxu0 0
    %352 = vmatpush1.bf16.msra.mxu0 0
    %353 = vmatprep.subr.bf16.mxu0 0
    %354 = vmatpush1.bf16.msra.mxu0 0
    %355 = vmatprep.subr.bf16.mxu0 0
    %356 = vmatpush1.bf16.msra.mxu0 0
    %357 = vmatprep.subr.bf16.mxu0 0
    %358 = vmatpush1.bf16.msra.mxu0 0
    %359 = vmatprep.mubr.bf16.mxu0 0
    %360 = vmatmul.mubr.bf16.gmra.mrb[0].mxu0 %v147
    %v361 = vpop.f32.mrb[0].mxu0
    %v362 = vadd.f32 %v187, %v361
    %v363 = vpop.f32.mrb[0].mxu0
    %v364 = vadd.f32 %v191, %v363
    %v365 = vpop.f32.mrb[0].mxu0
    %v366 = vpop.f32.mrb[0].mxu0
    %367 = vdwg.mxu0
    %368 = vmatprep.subr.bf16.mxu0 0
    %369 = vmatpush1.bf16.msra.mxu0 %v281
    %370 = vmatprep.subr.bf16.mxu0 0
    %371 = vmatpush1.bf16.msra.mxu0 %v284
    %372 = vmatprep.subr.bf16.mxu0 0
    %373 = vmatpush1.bf16.msra.mxu0 %v287
    %374 = vmatprep.subr.bf16.mxu0 0
    %375 = vmatpush1.bf16.msra.mxu0 %v290
    %376 = vmatprep.subr.bf16.mxu0 0
    %377 = vmatpush1.bf16.msra.mxu0 %v293
    %378 = vmatprep.subr.bf16.mxu0 0
    %379 = vmatpush1.bf16.msra.mxu0 %v296
    %380 = vmatprep.subr.bf16.mxu0 0
    %381 = vmatpush1.bf16.msra.mxu0 %v299
    %382 = vmatprep.subr.bf16.mxu0 0
    %383 = vmatpush1.bf16.msra.mxu0 %v302
    %384 = vmatprep.subr.bf16.mxu0 0
    %385 = vmatpush1.bf16.msra.mxu0 0
    %386 = vmatprep.subr.bf16.mxu0 0
    %387 = vmatpush1.bf16.msra.mxu0 0
    %388 = vmatprep.subr.bf16.mxu0 0
    %389 = vmatpush1.bf16.msra.mxu0 0
    %390 = vmatprep.subr.bf16.mxu0 0
    %391 = vmatpush1.bf16.msra.mxu0 0
    %392 = vmatprep.subr.bf16.mxu0 0
    %393 = vmatpush1.bf16.msra.mxu0 0
    %394 = vmatprep.subr.bf16.mxu0 0
    %395 = vmatpush1.bf16.msra.mxu0 0
    %396 = vmatprep.subr.bf16.mxu0 0
    %397 = vmatpush1.bf16.msra.mxu0 0
    %398 = vmatprep.subr.bf16.mxu0 0
    %399 = vmatpush1.bf16.msra.mxu0 0
    %400 = vmatprep.mubr.bf16.mxu0 0
    %401 = vmatmul.mubr.bf16.gmra.mrb[0].mxu0 %v147
    %v402 = vpop.f32.mrb[0].mxu0
    %v403 = vadd.f32 %v195, %v402
    %v404 = vpop.f32.mrb[0].mxu0
    %v405 = vpop.f32.mrb[0].mxu0
    %v406 = vpop.f32.mrb[0].mxu0
    %407 = vdwg.mxu0
    %v408 = vld [vmem:[#allocation10] sm:$0xff]
    %v409 = vld [vmem:[#allocation10 + $0x8] sm:$0xff]
    %v410 = vld [vmem:[#allocation10 + $0x10] sm:$0xff]
    %v411 = vld [vmem:[#allocation10 + $0x18] sm:$0xff]
    %v412 = vld [vmem:[#allocation10 + $0x20] sm:$0xff]
    %v413 = vld [vmem:[#allocation10 + $0x28] sm:$0xff]
    %v414 = vld [vmem:[#allocation10 + $0x30] sm:$0xff]
    %v415 = vld [vmem:[#allocation10 + $0x38] sm:$0xff]
    %v416 = vld [vmem:[#allocation10 + $0x40] sm:$0xff]
    %v417 = vld [vmem:[#allocation10 + $0x48] sm:$0xff]
    %v418 = vld [vmem:[#allocation10 + $0x50] sm:$0xff]
    %v419 = vld [vmem:[#allocation10 + $0x58] sm:$0xff]
    %v420 = vld [vmem:[#allocation10 + $0x60] sm:$0xff]
    %v421 = vld [vmem:[#allocation10 + $0x68] sm:$0xff]
    %v422 = vld [vmem:[#allocation10 + $0x70] sm:$0xff]
    %v423 = vld [vmem:[#allocation10 + $0x78] sm:$0xff]
    %v440 = vunpack.c.l.b16 %v408
    %v441 = vunpack.c.h.b16 %v408
    %v442 = vunpack.c.l.b16 %v409
    %v443 = vunpack.c.h.b16 %v409
    %v444 = vunpack.c.l.b16 %v410
    %v445 = vunpack.c.h.b16 %v410
    %v446 = vunpack.c.l.b16 %v411
    %v447 = vunpack.c.h.b16 %v411
    %v448 = vunpack.c.l.b16 %v412
    %v449 = vunpack.c.h.b16 %v412
    %v450 = vunpack.c.l.b16 %v413
    %v451 = vunpack.c.h.b16 %v413
    %v452 = vunpack.c.l.b16 %v414
    %v453 = vunpack.c.h.b16 %v414
    %v454 = vunpack.c.l.b16 %v415
    %v455 = vunpack.c.h.b16 %v415
    %v456 = vunpack.c.l.b16 %v416
    %v457 = vunpack.c.h.b16 %v416
    %v458 = vunpack.c.l.b16 %v417
    %v459 = vunpack.c.h.b16 %v417
    %v460 = vunpack.c.l.b16 %v418
    %v461 = vunpack.c.h.b16 %v418
    %v462 = vunpack.c.l.b16 %v419
    %v463 = vunpack.c.h.b16 %v419
    %v464 = vunpack.c.l.b16 %v420
    %v465 = vunpack.c.h.b16 %v420
    %v466 = vunpack.c.l.b16 %v421
    %v467 = vunpack.c.h.b16 %v421
    %v468 = vunpack.c.l.b16 %v422
    %v469 = vunpack.c.h.b16 %v422
    %v470 = vunpack.c.l.b16 %v423
    %v471 = vunpack.c.h.b16 %v423
    %v472 = vpack.c.b16 %v442, %v440
    %v473 = vpack.c.b16 %v443, %v441
    %v474 = vpack.c.b16 %v446, %v444
    %v475 = vpack.c.b16 %v447, %v445
    %v476 = vpack.c.b16 %v450, %v448
    %v477 = vpack.c.b16 %v451, %v449
    %v478 = vpack.c.b16 %v454, %v452
    %v479 = vpack.c.b16 %v455, %v453
    %v480 = vpack.c.b16 %v458, %v456
    %v481 = vpack.c.b16 %v459, %v457
    %v482 = vpack.c.b16 %v462, %v460
    %v483 = vpack.c.b16 %v463, %v461
    %v484 = vpack.c.b16 %v466, %v464
    %v485 = vpack.c.b16 %v467, %v465
    %v486 = vpack.c.b16 %v470, %v468
    %v487 = vpack.c.b16 %v471, %v469
    %504 = vmatprep.subr.bf16.mxu0 %v473
    %505 = vmatpush1.bf16.msra.mxu0 %v472
    %506 = vmatprep.subr.bf16.mxu0 %v475
    %507 = vmatpush1.bf16.msra.mxu0 %v474
    %508 = vmatprep.subr.bf16.mxu0 %v477
    %509 = vmatpush1.bf16.msra.mxu0 %v476
    %510 = vmatprep.subr.bf16.mxu0 %v479
    %511 = vmatpush1.bf16.msra.mxu0 %v478
    %512 = vmatprep.subr.bf16.mxu0 %v481
    %513 = vmatpush1.bf16.msra.mxu0 %v480
    %514 = vmatprep.subr.bf16.mxu0 %v483
    %515 = vmatpush1.bf16.msra.mxu0 %v482
    %516 = vmatprep.subr.bf16.mxu0 %v485
    %517 = vmatpush1.bf16.msra.mxu0 %v484
    %518 = vmatprep.subr.bf16.mxu0 %v487
    %519 = vmatpush1.bf16.msra.mxu0 %v486
    %520 = vmatprep.subr.bf16.mxu0 0
    %521 = vmatpush1.bf16.msra.mxu0 0
    %522 = vmatprep.subr.bf16.mxu0 0
    %523 = vmatpush1.bf16.msra.mxu0 0
    %524 = vmatprep.subr.bf16.mxu0 0
    %525 = vmatpush1.bf16.msra.mxu0 0
    %526 = vmatprep.subr.bf16.mxu0 0
    %527 = vmatpush1.bf16.msra.mxu0 0
    %528 = vmatprep.subr.bf16.mxu0 0
    %529 = vmatpush1.bf16.msra.mxu0 0
    %530 = vmatprep.subr.bf16.mxu0 0
    %531 = vmatpush1.bf16.msra.mxu0 0
    %532 = vmatprep.subr.bf16.mxu0 0
    %533 = vmatpush1.bf16.msra.mxu0 0
    %534 = vmatprep.subr.bf16.mxu0 0
    %535 = vmatpush1.bf16.msra.mxu0 0
    %536 = vmatprep.mubr.bf16.mxu0 0
    %537 = vmatmul.mubr.bf16.gmra.mrb[0].mxu0 %v149
    %v538 = vpop.f32.mrb[0].mxu0
    %v539 = vadd.f32 0.0, %v538
    %v540 = vpop.f32.mrb[0].mxu0
    %v541 = vadd.f32 0.0, %v540
    %v542 = vpop.f32.mrb[0].mxu0
    %v543 = vpop.f32.mrb[0].mxu0
    %544 = vdwg.mxu0
    %v545 = vadd.f32 %v362, %v539
    %v546 = vmul.f32 %v545, 0.5
    %v547 = vtanh.pop %v546
    %v548 = vadd.f32 %v547, 1.0
    %v549 = vmul.f32 %v548, 0.5
    %v550 = vadd.f32 %v364, %v541
    %v551 = vmul.f32 %v550, 0.5
    %v552 = vtanh.pop %v551
    %v553 = vadd.f32 %v552, 1.0
    %v554 = vmul.f32 %v553, 0.5
    %v555 = vmul.f32 %v549, %v148
    %v556 = vpack.c.bf16 %v555, %v555
    %v557 = vld [vmem:[#allocation11] sm:$0xf]
    %v558 = vld [vmem:[#allocation11 + $0x4] sm:$0xf]
    %v559 = vld [vmem:[#allocation11 + $0x8] sm:$0xf]
    %v560 = vld [vmem:[#allocation11 + $0xc] sm:$0xf]
    %v561 = vld [vmem:[#allocation11 + $0x10] sm:$0xf]
    %v562 = vld [vmem:[#allocation11 + $0x14] sm:$0xf]
    %v563 = vld [vmem:[#allocation11 + $0x18] sm:$0xf]
    %v564 = vld [vmem:[#allocation11 + $0x1c] sm:$0xf]
    %v565 = vld [vmem:[#allocation11 + $0x20] sm:$0xf]
    %v566 = vld [vmem:[#allocation11 + $0x24] sm:$0xf]
    %v567 = vld [vmem:[#allocation11 + $0x28] sm:$0xf]
    %v568 = vld [vmem:[#allocation11 + $0x2c] sm:$0xf]
    %v569 = vld [vmem:[#allocation11 + $0x30] sm:$0xf]
    %v570 = vld [vmem:[#allocation11 + $0x34] sm:$0xf]
    %v571 = vld [vmem:[#allocation11 + $0x38] sm:$0xf]
    %v572 = vld [vmem:[#allocation11 + $0x3c] sm:$0xf]
    %v589 = vunpack.c.l.b16 %v557
    %v590 = vunpack.c.l.b16 %v558
    %v591 = vunpack.c.l.b16 %v559
    %v592 = vunpack.c.l.b16 %v560
    %v593 = vunpack.c.l.b16 %v561
    %v594 = vunpack.c.l.b16 %v562
    %v595 = vunpack.c.l.b16 %v563
    %v596 = vunpack.c.l.b16 %v564
    %v597 = vunpack.c.l.b16 %v565
    %v598 = vunpack.c.l.b16 %v566
    %v599 = vunpack.c.l.b16 %v567
    %v600 = vunpack.c.l.b16 %v568
    %v601 = vunpack.c.l.b16 %v569
    %v602 = vunpack.c.l.b16 %v570
    %v603 = vunpack.c.l.b16 %v571
    %v604 = vunpack.c.l.b16 %v572
    %v605 = vpack.c.b16 %v590, %v589
    %v606 = vpack.c.b16 %v592, %v591
    %v607 = vpack.c.b16 %v594, %v593
    %v608 = vpack.c.b16 %v596, %v595
    %v609 = vpack.c.b16 %v598, %v597
    %v610 = vpack.c.b16 %v600, %v599
    %v611 = vpack.c.b16 %v602, %v601
    %v612 = vpack.c.b16 %v604, %v603
    %621 = vmatprep.subr.bf16.mxu0 0
    %622 = vmatpush1.bf16.msra.mxu0 %v605
    %623 = vmatprep.subr.bf16.mxu0 0
    %624 = vmatpush1.bf16.msra.mxu0 %v606
    %625 = vmatprep.subr.bf16.mxu0 0
    %626 = vmatpush1.bf16.msra.mxu0 %v607
    %627 = vmatprep.subr.bf16.mxu0 0
    %628 = vmatpush1.bf16.msra.mxu0 %v608
    %629 = vmatprep.subr.bf16.mxu0 0
    %630 = vmatpush1.bf16.msra.mxu0 %v609
    %631 = vmatprep.subr.bf16.mxu0 0
    %632 = vmatpush1.bf16.msra.mxu0 %v610
    %633 = vmatprep.subr.bf16.mxu0 0
    %634 = vmatpush1.bf16.msra.mxu0 %v611
    %635 = vmatprep.subr.bf16.mxu0 0
    %636 = vmatpush1.bf16.msra.mxu0 %v612
    %637 = vmatprep.subr.bf16.mxu0 0
    %638 = vmatpush1.bf16.msra.mxu0 0
    %639 = vmatprep.subr.bf16.mxu0 0
    %640 = vmatpush1.bf16.msra.mxu0 0
    %641 = vmatprep.subr.bf16.mxu0 0
    %642 = vmatpush1.bf16.msra.mxu0 0
    %643 = vmatprep.subr.bf16.mxu0 0
    %644 = vmatpush1.bf16.msra.mxu0 0
    %645 = vmatprep.subr.bf16.mxu0 0
    %646 = vmatpush1.bf16.msra.mxu0 0
    %647 = vmatprep.subr.bf16.mxu0 0
    %648 = vmatpush1.bf16.msra.mxu0 0
    %649 = vmatprep.subr.bf16.mxu0 0
    %650 = vmatpush1.bf16.msra.mxu0 0
    %651 = vmatprep.subr.bf16.mxu0 0
    %652 = vmatpush1.bf16.msra.mxu0 0
    %653 = vmatprep.mubr.bf16.mxu0 0
    %654 = vmatmul.mubr.bf16.gmra.mrb[0].mxu0 %v556
    %v655 = vpop.f32.mrb[0].mxu0
    %v656 = vadd.f32 0.0, %v655
    %v657 = vpop.f32.mrb[0].mxu0
    %v658 = vpop.f32.mrb[0].mxu0
    %v659 = vpop.f32.mrb[0].mxu0
    %660 = vdwg.mxu0
    %v661 = vadd.f32 %v403, %v656
    %v662 = vtanh.pop %v661
    %v663 = vsub.f32 %v662, %v148
    %v664 = vmul.f32 %v554, %v663
    %v665 = vadd.f32 %v148, %v664
    %v666 = vld [vmem:[#allocation7] sm:$0xff]
    %v667 = vadd.f32 %v666, %v665
    %v668 = vld [vmem:[#allocation14] sm:$0x1]
    %v670 = vlaneseq
    %v671 = vshrl.u32 %v670, 7
    %v672 = vsub.s32 0, %v671
    %v673 = vrot.slane %v668, %v672
    %vm675 = vcmp.gt.f32.partialorder %v667, %v673
    %v676 = vsel %vm675, %v667, 0.0
    %677 = vst [vmem:[#allocation17] sm:$0xff] %v676
    %v678 = vld [vmem:[#allocation16] sm:$0x1]
    %v680 = vlaneseq
    %v681 = vshrl.u32 %v680, 7
    %v682 = vsub.s32 0, %v681
    %v683 = vrot.slane %v678, %v682
    %v685 = vmul.f32 %v667, %v683
    %v686 = vsel %vm675, 0.0, %v685
    %687 = vst [vmem:[#allocation18] sm:$0xff] %v686
    // Predicated region
    $region74: #{tpu_custom_call.1} parent=1 // pred_check
      _
    $region75: #{tpu_custom_call.1} parent=1 // pred_check_branch
      %689 = sbr.rel (0) target = $region77
    $region76: #{tpu_custom_call.1} parent=1 // pred_region
      %s691 = ssub.s32 128, 128
      %692 = vsyncadd [#allocation4], %s691
      %s694 = sshll.u32 [#allocation17], 4
      %s695 = int_to_ptr.vmem [resolvable:$true] %s694
      %697 = dma.vmem_to_hbm [thread:$0]  %s695, 128, %s9, [#allocation4]
    $region77: #{tpu_custom_call.1} parent=1 // pred_fallthru
      _
    // Predicated region
    $region78: #{tpu_custom_call.1} parent=1 // pred_check
      _
    $region79: #{tpu_custom_call.1} parent=1 // pred_check_branch
      %699 = sbr.rel (0) target = $region81
    $region80: #{tpu_custom_call.1} parent=1 // pred_region
      %s701 = ssub.s32 128, 128
      %702 = vsyncadd [#allocation19], %s701
      %s704 = sshll.u32 [#allocation18], 4
      %s705 = int_to_ptr.vmem [resolvable:$true] %s704
      %707 = dma.vmem_to_hbm [thread:$0]  %s705, 128, %s10, [#allocation19]
    $region81: #{tpu_custom_call.1} parent=1 // pred_fallthru
      _
    // Predicated region
    $region82: #{tpu_custom_call.1} parent=1 // pred_check
      _
    $region83: #{tpu_custom_call.1} parent=1 // pred_check_branch
      %709 = sbr.rel (0) target = $region85
    $region84: #{tpu_custom_call.1} parent=1 // pred_region
      %710 = dma.done [#allocation4], 128
    $region85: #{tpu_custom_call.1} parent=1 // pred_fallthru
      _
    // Predicated region
    $region86: #{tpu_custom_call.1} parent=1 // pred_check
      _
    $region87: #{tpu_custom_call.1} parent=1 // pred_check_branch
      %712 = sbr.rel (0) target = $region89
    $region88: #{tpu_custom_call.1} parent=1 // pred_region
      %713 = dma.done [#allocation19], 128
    $region89: #{tpu_custom_call.1} parent=1 // pred_fallthru
      _
    %714 = vsyncpa [#allocation3], 1
    %715 = vsyncpa [#allocation6], 1
    %716 = vsyncpa [#allocation9], 1
    %717 = vsyncpa [#allocation12], 1
    %718 = vsyncpa [#allocation15], 1
    %719 = vsyncpa [#allocation4], 1
    %720 = vsyncpa [#allocation19], 1

// kernel: tpu_custom_call.1
$region0: #{tpu_custom_call.1}
  #allocation0 [shape = 'u32[]', space=smem, size = 0x4, offset = 0x4, fixed_abs, tag = 'smem constant byte address 0x4 - core index']
  #allocation1 [shape = 'u32[144,128]{1,0:T(1,128)}', space=vmem, size = 0x12000, scoped, tag = 'internal scratch']
  %s0 = inlined_call_operand.hbm [shape: bf16[8,128], index: 0, kind: input, shape index: {}]
  %s1 = inlined_call_operand.hbm [shape: f32[8,128], index: 1, kind: input, shape index: {}]
  %s2 = inlined_call_operand.hbm [shape: f32[8,128], index: 2, kind: input, shape index: {}, may-alias: {2,10}]
  %s3 = inlined_call_operand.hbm [shape: bf16[128,384], index: 3, kind: input, shape index: {}]
  %s4 = inlined_call_operand.hbm [shape: bf16[128,256], index: 4, kind: input, shape index: {}]
  %s5 = inlined_call_operand.hbm [shape: bf16[128,128], index: 5, kind: input, shape index: {}]
  %s6 = inlined_call_operand.hbm [shape: f32[1,384], index: 6, kind: input, shape index: {}]
  %s7 = inlined_call_operand.hbm [shape: f32[1,128], index: 7, kind: input, shape index: {}]
  %s8 = inlined_call_operand.hbm [shape: f32[1,128], index: 8, kind: input, shape index: {}]
  %s9 = inlined_call_operand.hbm [shape: f32[8,128], index: 9, kind: output, shape index: {0}]
  %s10 = inlined_call_operand.hbm [shape: f32[8,128], index: 10, kind: output, shape index: {1}, may-alias: {2,10}]
  %11 = xla_tuple %s9, %s10
  %s12 = sld [smem:[#allocation0]]
  $region90: #{tpu_custom_call.1} parent=0
    _
  %s14 = ssub.s32 1, %s12
  %s15 = scalar_select 0, %s14, %s12
  $region1: #{tpu_custom_call.1} parent=0
    #allocation2 [shape = 'u8[2048]{0}', space=vmem, size = 0x800, scoped, tag = 'input window, operand 0, single buffered']
    #allocation3 [shape = 's32[1]{0}', space=sflag, size = 0x4, scoped, tag = 'scoped memory for tpu_custom_call.1']
    #allocation4 [shape = 's32[1]{0}', space=sflag, size = 0x4, scoped, tag = 'scoped memory for tpu_custom_call.1']
    #allocation5 [shape = 'u8[4096]{0}', space=vmem, size = 0x1000, scoped, tag = 'input window, operand 1, single buffered']
    #allocation6 [shape = 's32[1]{0}', space=sflag, size = 0x4, scoped, tag = 'scoped memory for tpu_custom_call.1']
    #allocation7 [shape = 'u8[4096]{0}', space=vmem, size = 0x1000, scoped, tag = 'input window, operand 2, single buffered']
    #allocation8 [shape = 'u8[98304]{0}', space=vmem, size = 0x18000, scoped, tag = 'input window, operand 3, single buffered']
    #allocation9 [shape = 's32[1]{0}', space=sflag, size = 0x4, scoped, tag = 'scoped memory for tpu_custom_call.1']
    #allocation10 [shape = 'u8[65536]{0}', space=vmem, size = 0x10000, scoped, tag = 'input window, operand 4, single buffered']
    #allocation11 [shape = 'u8[32768]{0}', space=vmem, size = 0x8000, scoped, tag = 'input window, operand 5, single buffered']
    #allocation12 [shape = 's32[1]{0}', space=sflag, size = 0x4, scoped, tag = 'scoped memory for tpu_custom_call.1']
    #allocation13 [shape = 'u8[1536]{0}', space=vmem, size = 0x800, scoped, tag = 'input window, operand 6, single buffered']
    #allocation14 [shape = 'u8[512]{0}', space=vmem, size = 0x400, scoped, tag = 'input window, operand 7, single buffered']
    #allocation15 [shape = 's32[1]{0}', space=sflag, size = 0x4, scoped, tag = 'scoped memory for tpu_custom_call.1']
    #allocation16 [shape = 'u8[512]{0}', space=vmem, size = 0x400, scoped, tag = 'input window, operand 8, single buffered']
    #allocation17 [shape = 'u8[4096]{0}', space=vmem, size = 0x1000, scoped, tag = 'output window, operand 0, single buffered']
    #allocation18 [shape = 'u8[4096]{0}', space=vmem, size = 0x1000, scoped, tag = 'output window, operand 1, single buffered']
    #allocation19 [shape = 's32[1]{0}', space=sflag, size = 0x4, scoped, tag = 'scoped memory for tpu_custom_call.1']
    %16 = vsyncpa [#allocation3], 0
    %17 = vsyncpa [#allocation6], 0
    %18 = vsyncpa [#allocation9], 0
    %19 = vsyncpa [#allocation12], 0
    %20 = vsyncpa [#allocation15], 0
    %21 = vsyncpa [#allocation4], 0
    %22 = vsyncpa [#allocation19], 0
    // Predicated region
    $region2: #{tpu_custom_call.1} parent=1 // pred_check
      _
    $region3: #{tpu_custom_call.1} parent=1 // pred_check_branch
      %24 = sbr.rel (0) target = $region5
    $region4: #{tpu_custom_call.1} parent=1 // pred_region
      %s26 = ssub.s32 64, 64
      %27 = vsyncadd [#allocation3], %s26
      %s29 = sshll.u32 [#allocation2], 4
      %s30 = int_to_ptr.vmem [resolvable:$true] %s29
      %32 = dma.hbm_to_vmem [thread:$0]  %s0, 64, %s30, [#allocation3]
    $region5: #{tpu_custom_call.1} parent=1 // pred_fallthru
      _
    // Predicated region
    $region6: #{tpu_custom_call.1} parent=1 // pred_check
      _
    $region7: #{tpu_custom_call.1} parent=1 // pred_check_branch
      %34 = sbr.rel (0) target = $region9
    $region8: #{tpu_custom_call.1} parent=1 // pred_region
      %s36 = ssub.s32 128, 128
      %37 = vsyncadd [#allocation6], %s36
      %s39 = sshll.u32 [#allocation5], 4
      %s40 = int_to_ptr.vmem [resolvable:$true] %s39
      %42 = dma.hbm_to_vmem [thread:$0]  %s1, 128, %s40, [#allocation6]
    $region9: #{tpu_custom_call.1} parent=1 // pred_fallthru
      _
    // Predicated region
    $region10: #{tpu_custom_call.1} parent=1 // pred_check
      _
    $region11: #{tpu_custom_call.1} parent=1 // pred_check_branch
      %44 = sbr.rel (0) target = $region13
    $region12: #{tpu_custom_call.1} parent=1 // pred_region
      %s46 = ssub.s32 128, 128
      %47 = vsyncadd [#allocation6], %s46
      %s49 = sshll.u32 [#allocation7], 4
      %s50 = int_to_ptr.vmem [resolvable:$true] %s49
      %52 = dma.hbm_to_vmem [thread:$0]  %s2, 128, %s50, [#allocation6]
    $region13: #{tpu_custom_call.1} parent=1 // pred_fallthru
      _
    // Predicated region
    $region14: #{tpu_custom_call.1} parent=1 // pred_check
      _
    $region15: #{tpu_custom_call.1} parent=1 // pred_check_branch
      %54 = sbr.rel (0) target = $region17
    $region16: #{tpu_custom_call.1} parent=1 // pred_region
      %s56 = ssub.s32 3072, 3072
      %57 = vsyncadd [#allocation9], %s56
      %s58 = sshll.u32 [#allocation8], 4
      %s59 = int_to_ptr.vmem [resolvable:$true] %s58
      %64 = dma.hbm_to_vmem [thread:$0]  %s3, 3072, %s59, [#allocation9], 192, 192, 12
    $region17: #{tpu_custom_call.1} parent=1 // pred_fallthru
      _
    // Predicated region
    $region18: #{tpu_custom_call.1} parent=1 // pred_check
      _
    $region19: #{tpu_custom_call.1} parent=1 // pred_check_branch
      %66 = sbr.rel (0) target = $region21
    $region20: #{tpu_custom_call.1} parent=1 // pred_region
      %s68 = ssub.s32 2048, 2048
      %69 = vsyncadd [#allocation9], %s68
      %s70 = sshll.u32 [#allocation10], 4
      %s71 = int_to_ptr.vmem [resolvable:$true] %s70
      %76 = dma.hbm_to_vmem [thread:$0]  %s4, 2048, %s71, [#allocation9], 128, 128, 8
    $region21: #{tpu_custom_call.1} parent=1 // pred_fallthru
      _
    // Predicated region
    $region22: #{tpu_custom_call.1} parent=1 // pred_check
      _
    $region23: #{tpu_custom_call.1} parent=1 // pred_check_branch
      %78 = sbr.rel (0) target = $region25
    $region24: #{tpu_custom_call.1} parent=1 // pred_region
      %s80 = ssub.s32 1024, 1024
      %81 = vsyncadd [#allocation12], %s80
      %s82 = sshll.u32 [#allocation11], 4
      %s83 = int_to_ptr.vmem [resolvable:$true] %s82
      %88 = dma.hbm_to_vmem [thread:$0]  %s5, 1024, %s83, [#allocation12], 64, 64, 4
    $region25: #{tpu_custom_call.1} parent=1 // pred_fallthru
      _
    // Predicated region
    $region26: #{tpu_custom_call.1} parent=1 // pred_check
      _
    $region27: #{tpu_custom_call.1} parent=1 // pred_check_branch
      %90 = sbr.rel (0) target = $region29
    $region28: #{tpu_custom_call.1} parent=1 // pred_region
      %s92 = ssub.s32 48, 48
      %93 = vsyncadd [#allocation12], %s92
      %s95 = sshll.u32 [#allocation13], 4
      %s96 = int_to_ptr.vmem [resolvable:$true] %s95
      %98 = dma.hbm_to_vmem [thread:$0]  %s6, 48, %s96, [#allocation12]
    $region29: #{tpu_custom_call.1} parent=1 // pred_fallthru
      _
    // Predicated region
    $region30: #{tpu_custom_call.1} parent=1 // pred_check
      _
    $region31: #{tpu_custom_call.1} parent=1 // pred_check_branch
      %100 = sbr.rel (0) target = $region33
    $region32: #{tpu_custom_call.1} parent=1 // pred_region
      %s102 = ssub.s32 16, 16
      %103 = vsyncadd [#allocation15], %s102
      %s105 = sshll.u32 [#allocation14], 4
      %s106 = int_to_ptr.vmem [resolvable:$true] %s105
      %108 = dma.hbm_to_vmem [thread:$0]  %s7, 16, %s106, [#allocation15]
    $region33: #{tpu_custom_call.1} parent=1 // pred_fallthru
      _
    // Predicated region
    $region34: #{tpu_custom_call.1} parent=1 // pred_check
      _
    $region35: #{tpu_custom_call.1} parent=1 // pred_check_branch
      %110 = sbr.rel (0) target = $region37
    $region36: #{tpu_custom_call.1} parent=1 // pred_region
      %s112 = ssub.s32 16, 16
      %113 = vsyncadd [#allocation15], %s112
      %s115 = sshll.u32 [#allocation16], 4
      %s116 = int_to_ptr.vmem [resolvable:$true] %s115
      %118 = dma.hbm_to_vmem [thread:$0]  %s8, 16, %s116, [#allocation15]
    $region37: #{tpu_custom_call.1} parent=1 // pred_fallthru
      _
    // Predicated region
    $region38: #{tpu_custom_call.1} parent=1 // pred_check
      _
    $region39: #{tpu_custom_call.1} parent=1 // pred_check_branch
      %120 = sbr.rel (0) target = $region41
    $region40: #{tpu_custom_call.1} parent=1 // pred_region
      %121 = dma.done [#allocation3], 64
    $region41: #{tpu_custom_call.1} parent=1 // pred_fallthru
      _
    // Predicated region
    $region42: #{tpu_custom_call.1} parent=1 // pred_check
      _
    $region43: #{tpu_custom_call.1} parent=1 // pred_check_branch
      %123 = sbr.rel (0) target = $region45
    $region44: #{tpu_custom_call.1} parent=1 // pred_region
      %124 = dma.done [#allocation6], 128
    $region45: #{tpu_custom_call.1} parent=1 // pred_fallthru
      _
    // Predicated region
    $region46: #{tpu_custom_call.1} parent=1 // pred_check
      _
    $region47: #{tpu_custom_call.1} parent=1 // pred_check_branch
      %126 = sbr.rel (0) target = $region49
    $region48: #{tpu_custom_call.1} parent=1 // pred_region
      %127 = dma.done [#allocation6], 128
    $region49: #{tpu_custom_call.1} parent=1 // pred_fallthru
      _
    // Predicated region
    $region50: #{tpu_custom_call.1} parent=1 // pred_check
      _
    $region51: #{tpu_custom_call.1} parent=1 // pred_check_branch
      %129 = sbr.rel (0) target = $region53
    $region52: #{tpu_custom_call.1} parent=1 // pred_region
      %130 = dma.done [#allocation9], 3072
    $region53: #{tpu_custom_call.1} parent=1 // pred_fallthru
      _
    // Predicated region
    $region54: #{tpu_custom_call.1} parent=1 // pred_check
      _
    $region55: #{tpu_custom_call.1} parent=1 // pred_check_branch
      %132 = sbr.rel (0) target = $region57
    $region56: #{tpu_custom_call.1} parent=1 // pred_region
      %133 = dma.done [#allocation9], 2048
    $region57: #{tpu_custom_call.1} parent=1 // pred_fallthru
      _
    // Predicated region
    $region58: #{tpu_custom_call.1} parent=1 // pred_check
      _
    $region59: #{tpu_custom_call.1} parent=1 // pred_check_branch
      %135 = sbr.rel (0) target = $region61
    $region60: #{tpu_custom_call.1} parent=1 // pred_region
      %136 = dma.done [#allocation12], 1024
    $region61: #{tpu_custom_call.1} parent=1 // pred_fallthru
      _
    // Predicated region
    $region62: #{tpu_custom_call.1} parent=1 // pred_check
      _
    $region63: #{tpu_custom_call.1} parent=1 // pred_check_branch
      %138 = sbr.rel (0) target = $region65
    $region64: #{tpu_custom_call.1} parent=1 // pred_region
      %139 = dma.done [#allocation12], 48
    $region65: #{tpu_custom_call.1} parent=1 // pred_fallthru
      _
    // Predicated region
    $region66: #{tpu_custom_call.1} parent=1 // pred_check
      _
    $region67: #{tpu_custom_call.1} parent=1 // pred_check_branch
      %141 = sbr.rel (0) target = $region69
    $region68: #{tpu_custom_call.1} parent=1 // pred_region
      %142 = dma.done [#allocation15], 16
    $region69: #{tpu_custom_call.1} parent=1 // pred_fallthru
      _
    // Predicated region
    $region70: #{tpu_custom_call.1} parent=1 // pred_check
      _
    $region71: #{tpu_custom_call.1} parent=1 // pred_check_branch
      %144 = sbr.rel (0) target = $region73
    $region72: #{tpu_custom_call.1} parent=1 // pred_region
      %145 = dma.done [#allocation15], 16
    $region73: #{tpu_custom_call.1} parent=1 // pred_fallthru
      _
    %v147 = vld [vmem:[#allocation2] sm:$0xf]
    %v148 = vld [vmem:[#allocation5] sm:$0xff]
    %v149 = vpack.c.bf16 %v148, %v148
    %v150 = vld [vmem:[#allocation8] sm:$0xff]
    %v151 = vld [vmem:[#allocation8 + $0x8] sm:$0xf]
    %v152 = vld [vmem:[#allocation8 + $0xc] sm:$0xff]
    %v153 = vld [vmem:[#allocation8 + $0x14] sm:$0xf]
    %v154 = vld [vmem:[#allocation8 + $0x18] sm:$0xff]
    %v155 = vld [vmem:[#allocation8 + $0x20] sm:$0xf]
    %v156 = vld [vmem:[#allocation8 + $0x24] sm:$0xff]
    %v157 = vld [vmem:[#allocation8 + $0x2c] sm:$0xf]
    %v158 = vld [vmem:[#allocation8 + $0x30] sm:$0xff]
    %v159 = vld [vmem:[#allocation8 + $0x38] sm:$0xf]
    %v160 = vld [vmem:[#allocation8 + $0x3c] sm:$0xff]
    %v161 = vld [vmem:[#allocation8 + $0x44] sm:$0xf]
    %v162 = vld [vmem:[#allocation8 + $0x48] sm:$0xff]
    %v163 = vld [vmem:[#allocation8 + $0x50] sm:$0xf]
    %v164 = vld [vmem:[#allocation8 + $0x54] sm:$0xff]
    %v165 = vld [vmem:[#allocation8 + $0x5c] sm:$0xf]
    %v166 = vld [vmem:[#allocation8 + $0x60] sm:$0xff]
    %v167 = vld [vmem:[#allocation8 + $0x68] sm:$0xf]
    %v168 = vld [vmem:[#allocation8 + $0x6c] sm:$0xff]
    %v169 = vld [vmem:[#allocation8 + $0x74] sm:$0xf]
    %v170 = vld [vmem:[#allocation8 + $0x78] sm:$0xff]
    %v171 = vld [vmem:[#allocation8 + $0x80] sm:$0xf]
    %v172 = vld [vmem:[#allocation8 + $0x84] sm:$0xff]
    %v173 = vld [vmem:[#allocation8 + $0x8c] sm:$0xf]
    %v174 = vld [vmem:[#allocation8 + $0x90] sm:$0xff]
    %v175 = vld [vmem:[#allocation8 + $0x98] sm:$0xf]
    %v176 = vld [vmem:[#allocation8 + $0x9c] sm:$0xff]
    %v177 = vld [vmem:[#allocation8 + $0xa4] sm:$0xf]
    %v178 = vld [vmem:[#allocation8 + $0xa8] sm:$0xff]
    %v179 = vld [vmem:[#allocation8 + $0xb0] sm:$0xf]
    %v180 = vld [vmem:[#allocation8 + $0xb4] sm:$0xff]
    %v181 = vld [vmem:[#allocation8 + $0xbc] sm:$0xf]
    %v182 = vld [vmem:[#allocation13] sm:$0x7]
    %v184 = vlaneseq
    %v185 = vshrl.u32 %v184, 7
    %v186 = vsub.s32 0, %v185
    %v187 = vrot.slane %v182, %v186
    %v188 = vlaneseq
    %v189 = vshrl.u32 %v188, 7
    %v190 = vsub.s32 1, %v189
    %v191 = vrot.slane %v182, %v190
    %v192 = vlaneseq
    %v193 = vshrl.u32 %v192, 7
    %v194 = vsub.s32 2, %v193
    %v195 = vrot.slane %v182, %v194
    %v231 = vunpack.c.l.b16 %v150
    %v232 = vunpack.c.h.b16 %v150
    %v233 = vunpack.c.l.b16 %v151
    %v234 = vunpack.c.l.b16 %v152
    %v235 = vunpack.c.h.b16 %v152
    %v236 = vunpack.c.l.b16 %v153
    %v237 = vunpack.c.l.b16 %v154
    %v238 = vunpack.c.h.b16 %v154
    %v239 = vunpack.c.l.b16 %v155
    %v240 = vunpack.c.l.b16 %v156
    %v241 = vunpack.c.h.b16 %v156
    %v242 = vunpack.c.l.b16 %v157
    %v243 = vunpack.c.l.b16 %v158
    %v244 = vunpack.c.h.b16 %v158
    %v245 = vunpack.c.l.b16 %v159
    %v246 = vunpack.c.l.b16 %v160
    %v247 = vunpack.c.h.b16 %v160
    %v248 = vunpack.c.l.b16 %v161
    %v249 = vunpack.c.l.b16 %v162
    %v250 = vunpack.c.h.b16 %v162
    %v251 = vunpack.c.l.b16 %v163
    %v252 = vunpack.c.l.b16 %v164
    %v253 = vunpack.c.h.b16 %v164
    %v254 = vunpack.c.l.b16 %v165
    %v255 = vunpack.c.l.b16 %v166
    %v256 = vunpack.c.h.b16 %v166
    %v257 = vunpack.c.l.b16 %v167
    %v258 = vunpack.c.l.b16 %v168
    %v259 = vunpack.c.h.b16 %v168
    %v260 = vunpack.c.l.b16 %v169
    %v261 = vunpack.c.l.b16 %v170
    %v262 = vunpack.c.h.b16 %v170
    %v263 = vunpack.c.l.b16 %v171
    %v264 = vunpack.c.l.b16 %v172
    %v265 = vunpack.c.h.b16 %v172
    %v266 = vunpack.c.l.b16 %v173
    %v267 = vunpack.c.l.b16 %v174
    %v268 = vunpack.c.h.b16 %v174
    %v269 = vunpack.c.l.b16 %v175
    %v270 = vunpack.c.l.b16 %v176
    %v271 = vunpack.c.h.b16 %v176
    %v272 = vunpack.c.l.b16 %v177
    %v273 = vunpack.c.l.b16 %v178
    %v274 = vunpack.c.h.b16 %v178
    %v275 = vunpack.c.l.b16 %v179
    %v276 = vunpack.c.l.b16 %v180
    %v277 = vunpack.c.h.b16 %v180
    %v278 = vunpack.c.l.b16 %v181
    %v279 = vpack.c.b16 %v234, %v231
    %v280 = vpack.c.b16 %v235, %v232
    %v281 = vpack.c.b16 %v236, %v233
    %v282 = vpack.c.b16 %v240, %v237
    %v283 = vpack.c.b16 %v241, %v238
    %v284 = vpack.c.b16 %v242, %v239
    %v285 = vpack.c.b16 %v246, %v243
    %v286 = vpack.c.b16 %v247, %v244
    %v287 = vpack.c.b16 %v248, %v245
    %v288 = vpack.c.b16 %v252, %v249
    %v289 = vpack.c.b16 %v253, %v250
    %v290 = vpack.c.b16 %v254, %v251
    %v291 = vpack.c.b16 %v258, %v255
    %v292 = vpack.c.b16 %v259, %v256
    %v293 = vpack.c.b16 %v260, %v257
    %v294 = vpack.c.b16 %v264, %v261
    %v295 = vpack.c.b16 %v265, %v262
    %v296 = vpack.c.b16 %v266, %v263
    %v297 = vpack.c.b16 %v270, %v267
    %v298 = vpack.c.b16 %v271, %v268
    %v299 = vpack.c.b16 %v272, %v269
    %v300 = vpack.c.b16 %v276, %v273
    %v301 = vpack.c.b16 %v277, %v274
    %v302 = vpack.c.b16 %v278, %v275
    %327 = vmatprep.subr.bf16.mxu0 %v280
    %328 = vmatpush1.bf16.msra.mxu0 %v279
    %329 = vmatprep.subr.bf16.mxu0 %v283
    %330 = vmatpush1.bf16.msra.mxu0 %v282
    %331 = vmatprep.subr.bf16.mxu0 %v286
    %332 = vmatpush1.bf16.msra.mxu0 %v285
    %333 = vmatprep.subr.bf16.mxu0 %v289
    %334 = vmatpush1.bf16.msra.mxu0 %v288
    %335 = vmatprep.subr.bf16.mxu0 %v292
    %336 = vmatpush1.bf16.msra.mxu0 %v291
    %337 = vmatprep.subr.bf16.mxu0 %v295
    %338 = vmatpush1.bf16.msra.mxu0 %v294
    %339 = vmatprep.subr.bf16.mxu0 %v298
    %340 = vmatpush1.bf16.msra.mxu0 %v297
    %341 = vmatprep.subr.bf16.mxu0 %v301
    %342 = vmatpush1.bf16.msra.mxu0 %v300
    %343 = vmatprep.subr.bf16.mxu0 0
    %344 = vmatpush1.bf16.msra.mxu0 0
    %345 = vmatprep.subr.bf16.mxu0 0
    %346 = vmatpush1.bf16.msra.mxu0 0
    %347 = vmatprep.subr.bf16.mxu0 0
    %348 = vmatpush1.bf16.msra.mxu0 0
    %349 = vmatprep.subr.bf16.mxu0 0
    %350 = vmatpush1.bf16.msra.mxu0 0
    %351 = vmatprep.subr.bf16.mxu0 0
    %352 = vmatpush1.bf16.msra.mxu0 0
    %353 = vmatprep.subr.bf16.mxu0 0
    %354 = vmatpush1.bf16.msra.mxu0 0
    %355 = vmatprep.subr.bf16.mxu0 0
    %356 = vmatpush1.bf16.msra.mxu0 0
    %357 = vmatprep.subr.bf16.mxu0 0
    %358 = vmatpush1.bf16.msra.mxu0 0
    %359 = vmatprep.mubr.bf16.mxu0 0
    %360 = vmatmul.mubr.bf16.gmra.mrb[0].mxu0 %v147
    %v361 = vpop.f32.mrb[0].mxu0
    %v362 = vadd.f32 %v187, %v361
    %v363 = vpop.f32.mrb[0].mxu0
    %v364 = vadd.f32 %v191, %v363
    %v365 = vpop.f32.mrb[0].mxu0
    %v366 = vpop.f32.mrb[0].mxu0
    %367 = vdwg.mxu0
    %368 = vmatprep.subr.bf16.mxu0 0
    %369 = vmatpush1.bf16.msra.mxu0 %v281
    %370 = vmatprep.subr.bf16.mxu0 0
    %371 = vmatpush1.bf16.msra.mxu0 %v284
    %372 = vmatprep.subr.bf16.mxu0 0
    %373 = vmatpush1.bf16.msra.mxu0 %v287
    %374 = vmatprep.subr.bf16.mxu0 0
    %375 = vmatpush1.bf16.msra.mxu0 %v290
    %376 = vmatprep.subr.bf16.mxu0 0
    %377 = vmatpush1.bf16.msra.mxu0 %v293
    %378 = vmatprep.subr.bf16.mxu0 0
    %379 = vmatpush1.bf16.msra.mxu0 %v296
    %380 = vmatprep.subr.bf16.mxu0 0
    %381 = vmatpush1.bf16.msra.mxu0 %v299
    %382 = vmatprep.subr.bf16.mxu0 0
    %383 = vmatpush1.bf16.msra.mxu0 %v302
    %384 = vmatprep.subr.bf16.mxu0 0
    %385 = vmatpush1.bf16.msra.mxu0 0
    %386 = vmatprep.subr.bf16.mxu0 0
    %387 = vmatpush1.bf16.msra.mxu0 0
    %388 = vmatprep.subr.bf16.mxu0 0
    %389 = vmatpush1.bf16.msra.mxu0 0
    %390 = vmatprep.subr.bf16.mxu0 0
    %391 = vmatpush1.bf16.msra.mxu0 0
    %392 = vmatprep.subr.bf16.mxu0 0
    %393 = vmatpush1.bf16.msra.mxu0 0
    %394 = vmatprep.subr.bf16.mxu0 0
    %395 = vmatpush1.bf16.msra.mxu0 0
    %396 = vmatprep.subr.bf16.mxu0 0
    %397 = vmatpush1.bf16.msra.mxu0 0
    %398 = vmatprep.subr.bf16.mxu0 0
    %399 = vmatpush1.bf16.msra.mxu0 0
    %400 = vmatprep.mubr.bf16.mxu0 0
    %401 = vmatmul.mubr.bf16.gmra.mrb[0].mxu0 %v147
    %v402 = vpop.f32.mrb[0].mxu0
    %v403 = vadd.f32 %v195, %v402
    %v404 = vpop.f32.mrb[0].mxu0
    %v405 = vpop.f32.mrb[0].mxu0
    %v406 = vpop.f32.mrb[0].mxu0
    %407 = vdwg.mxu0
    %v408 = vld [vmem:[#allocation10] sm:$0xff]
    %v409 = vld [vmem:[#allocation10 + $0x8] sm:$0xff]
    %v410 = vld [vmem:[#allocation10 + $0x10] sm:$0xff]
    %v411 = vld [vmem:[#allocation10 + $0x18] sm:$0xff]
    %v412 = vld [vmem:[#allocation10 + $0x20] sm:$0xff]
    %v413 = vld [vmem:[#allocation10 + $0x28] sm:$0xff]
    %v414 = vld [vmem:[#allocation10 + $0x30] sm:$0xff]
    %v415 = vld [vmem:[#allocation10 + $0x38] sm:$0xff]
    %v416 = vld [vmem:[#allocation10 + $0x40] sm:$0xff]
    %v417 = vld [vmem:[#allocation10 + $0x48] sm:$0xff]
    %v418 = vld [vmem:[#allocation10 + $0x50] sm:$0xff]
    %v419 = vld [vmem:[#allocation10 + $0x58] sm:$0xff]
    %v420 = vld [vmem:[#allocation10 + $0x60] sm:$0xff]
    %v421 = vld [vmem:[#allocation10 + $0x68] sm:$0xff]
    %v422 = vld [vmem:[#allocation10 + $0x70] sm:$0xff]
    %v423 = vld [vmem:[#allocation10 + $0x78] sm:$0xff]
    %v440 = vunpack.c.l.b16 %v408
    %v441 = vunpack.c.h.b16 %v408
    %v442 = vunpack.c.l.b16 %v409
    %v443 = vunpack.c.h.b16 %v409
    %v444 = vunpack.c.l.b16 %v410
    %v445 = vunpack.c.h.b16 %v410
    %v446 = vunpack.c.l.b16 %v411
    %v447 = vunpack.c.h.b16 %v411
    %v448 = vunpack.c.l.b16 %v412
    %v449 = vunpack.c.h.b16 %v412
    %v450 = vunpack.c.l.b16 %v413
    %v451 = vunpack.c.h.b16 %v413
    %v452 = vunpack.c.l.b16 %v414
    %v453 = vunpack.c.h.b16 %v414
    %v454 = vunpack.c.l.b16 %v415
    %v455 = vunpack.c.h.b16 %v415
    %v456 = vunpack.c.l.b16 %v416
    %v457 = vunpack.c.h.b16 %v416
    %v458 = vunpack.c.l.b16 %v417
    %v459 = vunpack.c.h.b16 %v417
    %v460 = vunpack.c.l.b16 %v418
    %v461 = vunpack.c.h.b16 %v418
    %v462 = vunpack.c.l.b16 %v419
    %v463 = vunpack.c.h.b16 %v419
    %v464 = vunpack.c.l.b16 %v420
    %v465 = vunpack.c.h.b16 %v420
    %v466 = vunpack.c.l.b16 %v421
    %v467 = vunpack.c.h.b16 %v421
    %v468 = vunpack.c.l.b16 %v422
    %v469 = vunpack.c.h.b16 %v422
    %v470 = vunpack.c.l.b16 %v423
    %v471 = vunpack.c.h.b16 %v423
    %v472 = vpack.c.b16 %v442, %v440
    %v473 = vpack.c.b16 %v443, %v441
    %v474 = vpack.c.b16 %v446, %v444
    %v475 = vpack.c.b16 %v447, %v445
    %v476 = vpack.c.b16 %v450, %v448
    %v477 = vpack.c.b16 %v451, %v449
    %v478 = vpack.c.b16 %v454, %v452
    %v479 = vpack.c.b16 %v455, %v453
    %v480 = vpack.c.b16 %v458, %v456
    %v481 = vpack.c.b16 %v459, %v457
    %v482 = vpack.c.b16 %v462, %v460
    %v483 = vpack.c.b16 %v463, %v461
    %v484 = vpack.c.b16 %v466, %v464
    %v485 = vpack.c.b16 %v467, %v465
    %v486 = vpack.c.b16 %v470, %v468
    %v487 = vpack.c.b16 %v471, %v469
    %504 = vmatprep.subr.bf16.mxu0 %v473
    %505 = vmatpush1.bf16.msra.mxu0 %v472
    %506 = vmatprep.subr.bf16.mxu0 %v475
    %507 = vmatpush1.bf16.msra.mxu0 %v474
    %508 = vmatprep.subr.bf16.mxu0 %v477
    %509 = vmatpush1.bf16.msra.mxu0 %v476
    %510 = vmatprep.subr.bf16.mxu0 %v479
    %511 = vmatpush1.bf16.msra.mxu0 %v478
    %512 = vmatprep.subr.bf16.mxu0 %v481
    %513 = vmatpush1.bf16.msra.mxu0 %v480
    %514 = vmatprep.subr.bf16.mxu0 %v483
    %515 = vmatpush1.bf16.msra.mxu0 %v482
    %516 = vmatprep.subr.bf16.mxu0 %v485
    %517 = vmatpush1.bf16.msra.mxu0 %v484
    %518 = vmatprep.subr.bf16.mxu0 %v487
    %519 = vmatpush1.bf16.msra.mxu0 %v486
    %520 = vmatprep.subr.bf16.mxu0 0
    %521 = vmatpush1.bf16.msra.mxu0 0
    %522 = vmatprep.subr.bf16.mxu0 0
    %523 = vmatpush1.bf16.msra.mxu0 0
    %524 = vmatprep.subr.bf16.mxu0 0
    %525 = vmatpush1.bf16.msra.mxu0 0
    %526 = vmatprep.subr.bf16.mxu0 0
    %527 = vmatpush1.bf16.msra.mxu0 0
    %528 = vmatprep.subr.bf16.mxu0 0
    %529 = vmatpush1.bf16.msra.mxu0 0
    %530 = vmatprep.subr.bf16.mxu0 0
    %531 = vmatpush1.bf16.msra.mxu0 0
    %532 = vmatprep.subr.bf16.mxu0 0
    %533 = vmatpush1.bf16.msra.mxu0 0
    %534 = vmatprep.subr.bf16.mxu0 0
    %535 = vmatpush1.bf16.msra.mxu0 0
    %536 = vmatprep.mubr.bf16.mxu0 0
    %537 = vmatmul.mubr.bf16.gmra.mrb[0].mxu0 %v149
    %v538 = vpop.f32.mrb[0].mxu0
    %v539 = vadd.f32 0.0, %v538
    %v540 = vpop.f32.mrb[0].mxu0
    %v541 = vadd.f32 0.0, %v540
    %v542 = vpop.f32.mrb[0].mxu0
    %v543 = vpop.f32.mrb[0].mxu0
    %544 = vdwg.mxu0
    %v545 = vadd.f32 %v362, %v539
    %v546 = vmul.f32 %v545, 0.5
    %v547 = vtanh.pop %v546
    %v548 = vadd.f32 %v547, 1.0
    %v549 = vmul.f32 %v548, 0.5
    %v550 = vadd.f32 %v364, %v541
    %v551 = vmul.f32 %v550, 0.5
    %v552 = vtanh.pop %v551
    %v553 = vadd.f32 %v552, 1.0
    %v554 = vmul.f32 %v553, 0.5
    %v555 = vmul.f32 %v549, %v148
    %v556 = vpack.c.bf16 %v555, %v555
    %v557 = vld [vmem:[#allocation11] sm:$0xf]
    %v558 = vld [vmem:[#allocation11 + $0x4] sm:$0xf]
    %v559 = vld [vmem:[#allocation11 + $0x8] sm:$0xf]
    %v560 = vld [vmem:[#allocation11 + $0xc] sm:$0xf]
    %v561 = vld [vmem:[#allocation11 + $0x10] sm:$0xf]
    %v562 = vld [vmem:[#allocation11 + $0x14] sm:$0xf]
    %v563 = vld [vmem:[#allocation11 + $0x18] sm:$0xf]
    %v564 = vld [vmem:[#allocation11 + $0x1c] sm:$0xf]
    %v565 = vld [vmem:[#allocation11 + $0x20] sm:$0xf]
    %v566 = vld [vmem:[#allocation11 + $0x24] sm:$0xf]
    %v567 = vld [vmem:[#allocation11 + $0x28] sm:$0xf]
    %v568 = vld [vmem:[#allocation11 + $0x2c] sm:$0xf]
    %v569 = vld [vmem:[#allocation11 + $0x30] sm:$0xf]
    %v570 = vld [vmem:[#allocation11 + $0x34] sm:$0xf]
    %v571 = vld [vmem:[#allocation11 + $0x38] sm:$0xf]
    %v572 = vld [vmem:[#allocation11 + $0x3c] sm:$0xf]
    %v589 = vunpack.c.l.b16 %v557
    %v590 = vunpack.c.l.b16 %v558
    %v591 = vunpack.c.l.b16 %v559
    %v592 = vunpack.c.l.b16 %v560
    %v593 = vunpack.c.l.b16 %v561
    %v594 = vunpack.c.l.b16 %v562
    %v595 = vunpack.c.l.b16 %v563
    %v596 = vunpack.c.l.b16 %v564
    %v597 = vunpack.c.l.b16 %v565
    %v598 = vunpack.c.l.b16 %v566
    %v599 = vunpack.c.l.b16 %v567
    %v600 = vunpack.c.l.b16 %v568
    %v601 = vunpack.c.l.b16 %v569
    %v602 = vunpack.c.l.b16 %v570
    %v603 = vunpack.c.l.b16 %v571
    %v604 = vunpack.c.l.b16 %v572
    %v605 = vpack.c.b16 %v590, %v589
    %v606 = vpack.c.b16 %v592, %v591
    %v607 = vpack.c.b16 %v594, %v593
    %v608 = vpack.c.b16 %v596, %v595
    %v609 = vpack.c.b16 %v598, %v597
    %v610 = vpack.c.b16 %v600, %v599
    %v611 = vpack.c.b16 %v602, %v601
    %v612 = vpack.c.b16 %v604, %v603
    %621 = vmatprep.subr.bf16.mxu0 0
    %622 = vmatpush1.bf16.msra.mxu0 %v605
    %623 = vmatprep.subr.bf16.mxu0 0
    %624 = vmatpush1.bf16.msra.mxu0 %v606
    %625 = vmatprep.subr.bf16.mxu0 0
    %626 = vmatpush1.bf16.msra.mxu0 %v607
    %627 = vmatprep.subr.bf16.mxu0 0
    %628 = vmatpush1.bf16.msra.mxu0 %v608
    %629 = vmatprep.subr.bf16.mxu0 0
    %630 = vmatpush1.bf16.msra.mxu0 %v609
    %631 = vmatprep.subr.bf16.mxu0 0
    %632 = vmatpush1.bf16.msra.mxu0 %v610
    %633 = vmatprep.subr.bf16.mxu0 0
    %634 = vmatpush1.bf16.msra.mxu0 %v611
    %635 = vmatprep.subr.bf16.mxu0 0
    %636 = vmatpush1.bf16.msra.mxu0 %v612
    %637 = vmatprep.subr.bf16.mxu0 0
    %638 = vmatpush1.bf16.msra.mxu0 0
    %639 = vmatprep.subr.bf16.mxu0 0
    %640 = vmatpush1.bf16.msra.mxu0 0
    %641 = vmatprep.subr.bf16.mxu0 0
    %642 = vmatpush1.bf16.msra.mxu0 0
    %643 = vmatprep.subr.bf16.mxu0 0
    %644 = vmatpush1.bf16.msra.mxu0 0
    %645 = vmatprep.subr.bf16.mxu0 0
    %646 = vmatpush1.bf16.msra.mxu0 0
    %647 = vmatprep.subr.bf16.mxu0 0
    %648 = vmatpush1.bf16.msra.mxu0 0
    %649 = vmatprep.subr.bf16.mxu0 0
    %650 = vmatpush1.bf16.msra.mxu0 0
    %651 = vmatprep.subr.bf16.mxu0 0
    %652 = vmatpush1.bf16.msra.mxu0 0
    %653 = vmatprep.mubr.bf16.mxu0 0
    %654 = vmatmul.mubr.bf16.gmra.mrb[0].mxu0 %v556
    %v655 = vpop.f32.mrb[0].mxu0
    %v656 = vadd.f32 0.0, %v655
    %v657 = vpop.f32.mrb[0].mxu0
    %v658 = vpop.f32.mrb[0].mxu0
    %v659 = vpop.f32.mrb[0].mxu0
    %660 = vdwg.mxu0
    %v661 = vadd.f32 %v403, %v656
    %v662 = vtanh.pop %v661
    %v663 = vsub.f32 %v662, %v148
    %v664 = vmul.f32 %v554, %v663
    %v665 = vadd.f32 %v148, %v664
    %v666 = vld [vmem:[#allocation7] sm:$0xff]
    %v667 = vadd.f32 %v666, %v665
    %v668 = vld [vmem:[#allocation14] sm:$0x1]
    %v670 = vlaneseq
    %v671 = vshrl.u32 %v670, 7
    %v672 = vsub.s32 0, %v671
    %v673 = vrot.slane %v668, %v672
    %vm675 = vcmp.gt.f32.partialorder %v667, %v673
    %v676 = vsel %vm675, %v667, 0.0
    %677 = vst [vmem:[#allocation17] sm:$0xff] %v676
    %v678 = vld [vmem:[#allocation16] sm:$0x1]
    %v680 = vlaneseq
    %v681 = vshrl.u32 %v680, 7
    %v682 = vsub.s32 0, %v681
    %v683 = vrot.slane %v678, %v682
    %v685 = vmul.f32 %v667, %v683
    %v686 = vsel %vm675, 0.0, %v685
    %687 = vst [vmem:[#allocation18] sm:$0xff] %v686
    // Predicated region
    $region74: #{tpu_custom_call.1} parent=1 // pred_check
      _
    $region75: #{tpu_custom_call.1} parent=1 // pred_check_branch
      %689 = sbr.rel (0) target = $region77
    $region76: #{tpu_custom_call.1} parent=1 // pred_region
      %s691 = ssub.s32 128, 128
      %692 = vsyncadd [#allocation4], %s691
      %s694 = sshll.u32 [#allocation17], 4
      %s695 = int_to_ptr.vmem [resolvable:$true] %s694
      %697 = dma.vmem_to_hbm [thread:$0]  %s695, 128, %s9, [#allocation4]
    $region77: #{tpu_custom_call.1} parent=1 // pred_fallthru
      _
    // Predicated region
    $region78: #{tpu_custom_call.1} parent=1 // pred_check
      _
    $region79: #{tpu_custom_call.1} parent=1 // pred_check_branch
      %699 = sbr.rel (0) target = $region81
    $region80: #{tpu_custom_call.1} parent=1 // pred_region
      %s701 = ssub.s32 128, 128
      %702 = vsyncadd [#allocation19], %s701
      %s704 = sshll.u32 [#allocation18], 4
      %s705 = int_to_ptr.vmem [resolvable:$true] %s704
      %707 = dma.vmem_to_hbm [thread:$0]  %s705, 128, %s10, [#allocation19]
    $region81: #{tpu_custom_call.1} parent=1 // pred_fallthru
      _
    // Predicated region
    $region82: #{tpu_custom_call.1} parent=1 // pred_check
      _
    $region83: #{tpu_custom_call.1} parent=1 // pred_check_branch
      %709 = sbr.rel (0) target = $region85
    $region84: #{tpu_custom_call.1} parent=1 // pred_region
      %710 = dma.done [#allocation4], 128
    $region85: #{tpu_custom_call.1} parent=1 // pred_fallthru
      _
    // Predicated region
    $region86: #{tpu_custom_call.1} parent=1 // pred_check
      _
    $region87: #{tpu_custom_call.1} parent=1 // pred_check_branch
      %712 = sbr.rel (0) target = $region89
    $region88: #{tpu_custom_call.1} parent=1 // pred_region
      %713 = dma.done [#allocation19], 128
    $region89: #{tpu_custom_call.1} parent=1 // pred_fallthru
      _
    %714 = vsyncpa [#allocation3], 1
    %715 = vsyncpa [#allocation6], 1
    %716 = vsyncpa [#allocation9], 1
    %717 = vsyncpa [#allocation12], 1
    %718 = vsyncpa [#allocation15], 1
    %719 = vsyncpa [#allocation4], 1
    %720 = vsyncpa [#allocation19], 1

</llo_original>
